<compile_context>
chip_gen: v5e
topology: v5e:2x2
jax: 0.10.0
libtpu: 0.0.40
codegen_flags: <defaults>
</compile_context>

<pallas_src>
import functools

import jax
import jax.numpy as jnp
from jax.experimental import pallas as pl
from jax.experimental.pallas import tpu as pltpu


# --------------------------------------------------------------------------- #
# Kernel
# --------------------------------------------------------------------------- #
def _hidden_layer(h, w_ref, b_ref):
    """One Linear+ReLU: (out,in) @ (in,TB) -> (out,TB).

    MXU operands are bf16 with f32 accumulation; the epilogue (bias + ReLU)
    runs in the bias dtype (bf16 on v6e/v7x, f32 on v4/v5).
    """
    a = jnp.dot(w_ref[...], h, preferred_element_type=jnp.float32)
    a = a.astype(b_ref.dtype) + b_ref[...]
    return jnp.maximum(a, 0)


def mlp_kernel(x_ref,
               w1_ref, b1_ref,
               w2_ref, b2_ref,
               w3_ref, b3_ref,
               w4_ref, b4_ref,
               w5_ref, b5_ref,
               o_ref):
    """Fused MLP forward for one (features, TB) batch tile."""
    h = x_ref[...]                                               # (6,  TB) bf16
    h = _hidden_layer(h, w1_ref, b1_ref).astype(jnp.bfloat16)    # (32, TB)
    h = _hidden_layer(h, w2_ref, b2_ref).astype(jnp.bfloat16)    # (64, TB)
    h = _hidden_layer(h, w3_ref, b3_ref).astype(jnp.bfloat16)    # (64, TB)
    h = _hidden_layer(h, w4_ref, b4_ref)                         # (32, TB) f32
    h = h.astype(jnp.float32)                                    # no-op (b4 is f32)

    # Linear(32 -> 1): VPU broadcast-mul + sublane reduce (XLU); avoids an MXU
    # push whose output would be 127/128 padding. Result (1, TB) is lane-dense.
    out = jnp.sum(w5_ref[...] * h, axis=0, keepdims=True) + b5_ref[...]
    o_ref[...] = out.astype(o_ref.dtype)


# --------------------------------------------------------------------------- #
# Parameter / tile plumbing
# --------------------------------------------------------------------------- #
def _use_bf16_epilogue():
    """bf16 bias/ReLU only on chips with a bf16 VPU (v6e / v7x)."""
    try:
        kind = jax.devices()[0].device_kind.lower()
    except Exception:
        return True
    return not ("v5" in kind or "v4" in kind)


def prepare_params(params, *, bf16_epilogue=True):
    """[(W (in,out) f32, b (1,out) f32)] x 5 -> flat kernel operands.

    Layers 1-4: W^T as (out, in) bf16; biases for layers 1-3 in the epilogue
    dtype, layer-4 bias f32. Layer 5: W as (32, 1) f32, b as (1, 1) f32.
    """
    ep = jnp.bfloat16 if bf16_epilogue else jnp.float32
    flat = []
    n = len(params)
    for li, (w, b) in enumerate(params):
        if li < n - 1:
            flat.append(jnp.asarray(w.T, jnp.bfloat16))                 # (out, in)
            bias_dtype = ep if li < n - 2 else jnp.float32              # layer-4 bias f32
            flat.append(jnp.asarray(b.T, bias_dtype))                   # (out, 1)
        else:
            flat.append(jnp.asarray(w, jnp.float32))                    # (32, 1)
            flat.append(jnp.asarray(b, jnp.float32))                    # (1, 1)
    return flat


def _default_block_batch(B):
    """Pick TB: as large as possible (<= 8192 rows), >= 2 even tiles when B is
    large enough (v7x has 2 TCs sharded by the 'parallel' grid axis)."""
    lane_blocks = -(-B // 128)              # number of 128-row lane groups
    if lane_blocks <= 4:
        return lane_blocks * 128            # tiny batch: single tile
    cap_blocks = 8192 // 128                # 8192-row cap fits every gen's scoped VMEM
    n_tiles = max(2, -(-lane_blocks // cap_blocks))
    if n_tiles % 2:
        n_tiles += 1                        # even tile count -> balanced across 2 TCs
    tile_blocks = -(-lane_blocks // n_tiles)
    return tile_blocks * 128


# --------------------------------------------------------------------------- #
# pallas_call wrappers
# --------------------------------------------------------------------------- #
def simple_nn_apply_feature_major(x_fm, flat_params, *, block_batch=None):
    """Feature-major entry point: x_fm (D, B) -> (1, B) f32.

    Preferred when the caller can supply feature-major data (no wrapper-side
    relayout at all).
    """
    D, B = x_fm.shape
    TB = int(block_batch) if block_batch is not None else _default_block_batch(B)
    assert TB % 128 == 0, "batch tile must be a multiple of 128 lanes"
    n_tiles = pl.cdiv(B, TB)
    B_pad = n_tiles * TB

    x_fm = x_fm.astype(jnp.bfloat16)
    if B_pad != B:
        x_fm = jnp.pad(x_fm, ((0, 0), (0, B_pad - B)))           # ragged tail -> zeros

    in_specs = [pl.BlockSpec((D, TB), lambda i: (0, i))]
    for a in flat_params:
        # Full-shape block, constant index map -> DMA'd once, VMEM-resident.
        in_specs.append(pl.BlockSpec(a.shape, lambda i: (0, 0)))
    out_specs = pl.BlockSpec((1, TB), lambda i: (0, i))

    param_bytes = sum(a.size * a.dtype.itemsize for a in flat_params)
    cost = pl.CostEstimate(
        flops=2 * B_pad * (D * 32 + 32 * 64 + 64 * 64 + 64 * 32 + 32),
        transcendentals=0,
        bytes_accessed=B_pad * (D * 2 + 4) + param_bytes,
    )

    compiler_kwargs = dict(dimension_semantics=("parallel",))     # megacore on v7x
    est_vmem = TB * 1200 + (2 << 20)                               # live intermediates bound
    if est_vmem > (14 << 20):
        # Only override the scoped default (16 MiB on v5e) for big user tiles;
        # 48 MiB stays under v7x's 64 MiB physical VMEM.
        compiler_kwargs["vmem_limit_bytes"] = min(est_vmem + (8 << 20), 48 << 20)

    out_fm = pl.pallas_call(
        mlp_kernel,
        out_shape=jax.ShapeDtypeStruct((1, B_pad), jnp.float32),
        grid=(n_tiles,),
        in_specs=in_specs,
        out_specs=out_specs,
        compiler_params=pltpu.CompilerParams(**compiler_kwargs),
        cost_estimate=cost,
    )(x_fm, *flat_params)

    return out_fm[:, :B] if B_pad != B else out_fm


def simple_nn_forward(x, params, *, min_pallas_batch=128, block_batch=None):
    """PyTorch-compatible forward: x (B, 6) f32 -> (B, 1) f32."""
    if x.shape[0] < min_pallas_batch:
        # Tiny batches are dispatch/overhead-bound -> plain fused XLA.
        return reference_forward(x, params)
    flat = prepare_params(params, bf16_epilogue=_use_bf16_epilogue())
    # Single fused relayout: transpose + bf16 cast (halves pre-kernel HBM bytes
    # vs. the old f32 transpose+pad).
    x_fm = x.T.astype(jnp.bfloat16)                               # (6, B)
    out_fm = simple_nn_apply_feature_major(x_fm, flat, block_batch=block_batch)
    return out_fm.T                                               # (1,B)->(B,1): ~free


# --------------------------------------------------------------------------- #
# Reference / init
# --------------------------------------------------------------------------- #
def init_params(key, input_dim=6, h_dims=None):
    """Deterministic init mimicking nn.Linear's U(-1/sqrt(fan_in), 1/sqrt(fan_in))."""
    if h_dims is None:
        h_dims = [32, 64, 64, 32]
    dims = [input_dim] + h_dims + [1]
    params = []
    for i in range(len(dims) - 1):
        fan_in, fan_out = dims[i], dims[i + 1]
        key, kw, kb = jax.random.split(key, 3)
        bound = 1.0 / jnp.sqrt(jnp.float32(fan_in))
        w = jax.random.uniform(kw, (fan_in, fan_out), jnp.float32, -bound, bound)
        b = jax.random.uniform(kb, (1, fan_out), jnp.float32, -bound, bound)
        params.append((w, b))
    return params


def reference_forward(x, params):
    h = x
    for i, (w, b) in enumerate(params):
        h = h @ w + b
        if i < len(params) - 1:
            h = jnp.maximum(h, 0.0)
    return h


# --------------------------------------------------------------------------- #
# Test
# --------------------------------------------------------------------------- #
if __name__ == "__main__":
    key = jax.random.PRNGKey(0)
    key, kx = jax.random.split(key)

    # Small but representative: ragged batch (pads 1000 -> 1024) and the default
    # TB heuristic gives a 2-step, 512-row-tile grid (exercises pipelining,
    # padding, and the even-tile-count path).
    batch, input_dim = 1000, 6
    x = jax.random.normal(kx, (batch, input_dim), jnp.float32)
    params = init_params(key, input_dim=input_dim)

    fwd = jax.jit(lambda xx: simple_nn_forward(xx, params))
    out = jax.block_until_ready(fwd(x))

    ref = reference_forward(x, params)
    assert out.shape == (batch, 1)
    # bf16 MXU operands / bf16 epilogue with f32 accumulation -> loose tolerance
    # vs. the f32 reference.
    assert jnp.allclose(out, ref, atol=5e-2, rtol=5e-2), (
        f"mismatch vs reference (max abs err={jnp.max(jnp.abs(out - ref))})")

    print("KERNEL_OK")
</pallas_src>

<mosaic_0001>
module attributes {stable_mosaic.version = 11 : i64} {
  func.func @mlp_kernel(%arg0: i32, %arg1: memref<6x512xbf16, #tpu.memory_space<vmem>>, %arg2: memref<32x6xbf16, #tpu.memory_space<vmem>>, %arg3: memref<32x1xbf16, #tpu.memory_space<vmem>>, %arg4: memref<64x32xbf16, #tpu.memory_space<vmem>>, %arg5: memref<64x1xbf16, #tpu.memory_space<vmem>>, %arg6: memref<64x64xbf16, #tpu.memory_space<vmem>>, %arg7: memref<64x1xbf16, #tpu.memory_space<vmem>>, %arg8: memref<32x64xbf16, #tpu.memory_space<vmem>>, %arg9: memref<32x1xf32, #tpu.memory_space<vmem>>, %arg10: memref<32x1xf32, #tpu.memory_space<vmem>>, %arg11: memref<1x1xf32, #tpu.memory_space<vmem>>, %arg12: memref<1x512xf32, #tpu.memory_space<vmem>>) attributes {dimension_semantics = [#tpu.dimension_semantics<parallel>], iteration_bounds = array<i64: 2>, scalar_prefetch = 0 : i64, scratch_operands = 0 : i64, tpu.core_type = #tpu.core_type<tc>, window_params = [{transform_indices = @transform_0, window_bounds = array<i64: 6, 512>}, {pipeline_mode = #tpu.pipeline_mode<synchronous>, transform_indices = @transform_1, window_bounds = array<i64: 32, 6>}, {pipeline_mode = #tpu.pipeline_mode<synchronous>, transform_indices = @transform_2, window_bounds = array<i64: 32, 1>}, {pipeline_mode = #tpu.pipeline_mode<synchronous>, transform_indices = @transform_3, window_bounds = array<i64: 64, 32>}, {pipeline_mode = #tpu.pipeline_mode<synchronous>, transform_indices = @transform_4, window_bounds = array<i64: 64, 1>}, {pipeline_mode = #tpu.pipeline_mode<synchronous>, transform_indices = @transform_5, window_bounds = array<i64: 64, 64>}, {pipeline_mode = #tpu.pipeline_mode<synchronous>, transform_indices = @transform_6, window_bounds = array<i64: 64, 1>}, {pipeline_mode = #tpu.pipeline_mode<synchronous>, transform_indices = @transform_7, window_bounds = array<i64: 32, 64>}, {pipeline_mode = #tpu.pipeline_mode<synchronous>, transform_indices = @transform_8, window_bounds = array<i64: 32, 1>}, {pipeline_mode = #tpu.pipeline_mode<synchronous>, transform_indices = @transform_9, window_bounds = array<i64: 32, 1>}, {pipeline_mode = #tpu.pipeline_mode<synchronous>, transform_indices = @transform_10, window_bounds = array<i64: 1, 1>}, {transform_indices = @transform_11, window_bounds = array<i64: 1, 512>}]} {
    %c0 = arith.constant 0 : index
    %c0_0 = arith.constant 0 : index
    %0 = vector.load %arg1[%c0, %c0_0] : memref<6x512xbf16, #tpu.memory_space<vmem>>, vector<6x512xbf16>
    %c0_1 = arith.constant 0 : index
    %c0_2 = arith.constant 0 : index
    %1 = vector.load %arg2[%c0_1, %c0_2] : memref<32x6xbf16, #tpu.memory_space<vmem>>, vector<32x6xbf16>
    %cst = arith.constant dense<0.000000e+00> : vector<32x512xf32>
    %2 = tpu.matmul %1, %0, %cst {dimension_numbers = #tpu.dot_dimension_numbers<[1], [0], [0], [1], [0, 0, 1, 1], [], []>} : vector<32x6xbf16>, vector<6x512xbf16>, vector<32x512xf32> -> vector<32x512xf32>
    %3 = arith.truncf %2 : vector<32x512xf32> to vector<32x512xbf16>
    %c0_3 = arith.constant 0 : index
    %c0_4 = arith.constant 0 : index
    %4 = vector.load %arg3[%c0_3, %c0_4] : memref<32x1xbf16, #tpu.memory_space<vmem>>, vector<32x1xbf16>
    %5 = vector.broadcast %4 : vector<32x1xbf16> to vector<32x512xbf16>
    %6 = arith.addf %3, %5 : vector<32x512xbf16>
    %cst_5 = arith.constant 0.000000e+00 : bf16
    %7 = vector.broadcast %cst_5 : bf16 to vector<32x512xbf16>
    %8 = arith.maximumf %6, %7 : vector<32x512xbf16>
    %c0_6 = arith.constant 0 : index
    %c0_7 = arith.constant 0 : index
    %9 = vector.load %arg4[%c0_6, %c0_7] : memref<64x32xbf16, #tpu.memory_space<vmem>>, vector<64x32xbf16>
    %cst_8 = arith.constant dense<0.000000e+00> : vector<64x512xf32>
    %10 = tpu.matmul %9, %8, %cst_8 {dimension_numbers = #tpu.dot_dimension_numbers<[1], [0], [0], [1], [0, 0, 1, 1], [], []>} : vector<64x32xbf16>, vector<32x512xbf16>, vector<64x512xf32> -> vector<64x512xf32>
    %11 = arith.truncf %10 : vector<64x512xf32> to vector<64x512xbf16>
    %c0_9 = arith.constant 0 : index
    %c0_10 = arith.constant 0 : index
    %12 = vector.load %arg5[%c0_9, %c0_10] : memref<64x1xbf16, #tpu.memory_space<vmem>>, vector<64x1xbf16>
    %13 = vector.broadcast %12 : vector<64x1xbf16> to vector<64x512xbf16>
    %14 = arith.addf %11, %13 : vector<64x512xbf16>
    %cst_11 = arith.constant 0.000000e+00 : bf16
    %15 = vector.broadcast %cst_11 : bf16 to vector<64x512xbf16>
    %16 = arith.maximumf %14, %15 : vector<64x512xbf16>
    %c0_12 = arith.constant 0 : index
    %c0_13 = arith.constant 0 : index
    %17 = vector.load %arg6[%c0_12, %c0_13] : memref<64x64xbf16, #tpu.memory_space<vmem>>, vector<64x64xbf16>
    %cst_14 = arith.constant dense<0.000000e+00> : vector<64x512xf32>
    %18 = tpu.matmul %17, %16, %cst_14 {dimension_numbers = #tpu.dot_dimension_numbers<[1], [0], [0], [1], [0, 0, 1, 1], [], []>} : vector<64x64xbf16>, vector<64x512xbf16>, vector<64x512xf32> -> vector<64x512xf32>
    %19 = arith.truncf %18 : vector<64x512xf32> to vector<64x512xbf16>
    %c0_15 = arith.constant 0 : index
    %c0_16 = arith.constant 0 : index
    %20 = vector.load %arg7[%c0_15, %c0_16] : memref<64x1xbf16, #tpu.memory_space<vmem>>, vector<64x1xbf16>
    %21 = vector.broadcast %20 : vector<64x1xbf16> to vector<64x512xbf16>
    %22 = arith.addf %19, %21 : vector<64x512xbf16>
    %cst_17 = arith.constant 0.000000e+00 : bf16
    %23 = vector.broadcast %cst_17 : bf16 to vector<64x512xbf16>
    %24 = arith.maximumf %22, %23 : vector<64x512xbf16>
    %c0_18 = arith.constant 0 : index
    %c0_19 = arith.constant 0 : index
    %25 = vector.load %arg8[%c0_18, %c0_19] : memref<32x64xbf16, #tpu.memory_space<vmem>>, vector<32x64xbf16>
    %cst_20 = arith.constant dense<0.000000e+00> : vector<32x512xf32>
    %26 = tpu.matmul %25, %24, %cst_20 {dimension_numbers = #tpu.dot_dimension_numbers<[1], [0], [0], [1], [0, 0, 1, 1], [], []>} : vector<32x64xbf16>, vector<64x512xbf16>, vector<32x512xf32> -> vector<32x512xf32>
    %c0_21 = arith.constant 0 : index
    %c0_22 = arith.constant 0 : index
    %27 = vector.load %arg9[%c0_21, %c0_22] : memref<32x1xf32, #tpu.memory_space<vmem>>, vector<32x1xf32>
    %28 = vector.broadcast %27 : vector<32x1xf32> to vector<32x512xf32>
    %29 = arith.addf %26, %28 : vector<32x512xf32>
    %cst_23 = arith.constant 0.000000e+00 : f32
    %30 = vector.broadcast %cst_23 : f32 to vector<32x512xf32>
    %31 = arith.maximumf %29, %30 : vector<32x512xf32>
    %c0_24 = arith.constant 0 : index
    %c0_25 = arith.constant 0 : index
    %32 = vector.load %arg10[%c0_24, %c0_25] : memref<32x1xf32, #tpu.memory_space<vmem>>, vector<32x1xf32>
    %33 = vector.broadcast %32 : vector<32x1xf32> to vector<32x512xf32>
    %34 = arith.mulf %33, %31 : vector<32x512xf32>
    %cst_26 = arith.constant dense<0.000000e+00> : vector<512xf32>
    %35 = vector.multi_reduction <add>, %34, %cst_26 [0] : vector<32x512xf32> to vector<512xf32>
    %36 = vector.shape_cast %35 : vector<512xf32> to vector<1x512xf32>
    %c0_27 = arith.constant 0 : index
    %c0_28 = arith.constant 0 : index
    %37 = vector.load %arg11[%c0_27, %c0_28] : memref<1x1xf32, #tpu.memory_space<vmem>>, vector<1x1xf32>
    %38 = vector.broadcast %37 : vector<1x1xf32> to vector<1x512xf32>
    %39 = arith.addf %36, %38 : vector<1x512xf32>
    %c0_29 = arith.constant 0 : index
    %c0_30 = arith.constant 0 : index
    %40 = vector.load %arg12[%c0_29, %c0_30] : memref<1x512xf32, #tpu.memory_space<vmem>>, vector<1x512xf32>
    tpu.vector_store %arg12[%c0_29, %c0_30], %39 {strides = array<i32>} : memref<1x512xf32, #tpu.memory_space<vmem>>, vector<1x512xf32>,
    return
  }
  func.func @transform_0(%arg0: i32) -> (i32, i32) {
    %c0_i32 = arith.constant 0 : i32
    %c0_i32_0 = arith.constant 0 : i32
    return %c0_i32, %arg0 : i32, i32
  }
  func.func @transform_1(%arg0: i32) -> (i32, i32) {
    %c0_i32 = arith.constant 0 : i32
    %c0_i32_0 = arith.constant 0 : i32
    %c0_i32_1 = arith.constant 0 : i32
    return %c0_i32, %c0_i32_0 : i32, i32
  }
  func.func @transform_2(%arg0: i32) -> (i32, i32) {
    %c0_i32 = arith.constant 0 : i32
    %c0_i32_0 = arith.constant 0 : i32
    %c0_i32_1 = arith.constant 0 : i32
    return %c0_i32, %c0_i32_0 : i32, i32
  }
  func.func @transform_3(%arg0: i32) -> (i32, i32) {
    %c0_i32 = arith.constant 0 : i32
    %c0_i32_0 = arith.constant 0 : i32
    %c0_i32_1 = arith.constant 0 : i32
    return %c0_i32, %c0_i32_0 : i32, i32
  }
  func.func @transform_4(%arg0: i32) -> (i32, i32) {
    %c0_i32 = arith.constant 0 : i32
    %c0_i32_0 = arith.constant 0 : i32
    %c0_i32_1 = arith.constant 0 : i32
    return %c0_i32, %c0_i32_0 : i32, i32
  }
  func.func @transform_5(%arg0: i32) -> (i32, i32) {
    %c0_i32 = arith.constant 0 : i32
    %c0_i32_0 = arith.constant 0 : i32
    %c0_i32_1 = arith.constant 0 : i32
    return %c0_i32, %c0_i32_0 : i32, i32
  }
  func.func @transform_6(%arg0: i32) -> (i32, i32) {
    %c0_i32 = arith.constant 0 : i32
    %c0_i32_0 = arith.constant 0 : i32
    %c0_i32_1 = arith.constant 0 : i32
    return %c0_i32, %c0_i32_0 : i32, i32
  }
  func.func @transform_7(%arg0: i32) -> (i32, i32) {
    %c0_i32 = arith.constant 0 : i32
    %c0_i32_0 = arith.constant 0 : i32
    %c0_i32_1 = arith.constant 0 : i32
    return %c0_i32, %c0_i32_0 : i32, i32
  }
  func.func @transform_8(%arg0: i32) -> (i32, i32) {
    %c0_i32 = arith.constant 0 : i32
    %c0_i32_0 = arith.constant 0 : i32
    %c0_i32_1 = arith.constant 0 : i32
    return %c0_i32, %c0_i32_0 : i32, i32
  }
  func.func @transform_9(%arg0: i32) -> (i32, i32) {
    %c0_i32 = arith.constant 0 : i32
    %c0_i32_0 = arith.constant 0 : i32
    %c0_i32_1 = arith.constant 0 : i32
    return %c0_i32, %c0_i32_0 : i32, i32
  }
  func.func @transform_10(%arg0: i32) -> (i32, i32) {
    %c0_i32 = arith.constant 0 : i32
    %c0_i32_0 = arith.constant 0 : i32
    %c0_i32_1 = arith.constant 0 : i32
    return %c0_i32, %c0_i32_0 : i32, i32
  }
  func.func @transform_11(%arg0: i32) -> (i32, i32) {
    %c0_i32 = arith.constant 0 : i32
    %c0_i32_0 = arith.constant 0 : i32
    return %c0_i32, %arg0 : i32, i32
  }
}

</mosaic_0001>

<llo_original>
// kernel: _lambda_.1
$region0: #{_lambda_.1}
  #allocation0 [shape = 'u32[]', space=smem, size = 0x4, offset = 0x4, fixed_abs, tag = 'smem constant byte address 0x4 - core index']
  #allocation1 [shape = 'u32[72,128]{1,0:T(1,128)}', space=vmem, size = 0x9000, scoped, tag = 'internal scratch']
  #allocation2 [shape = 'f32[1,1]{1,0:T(1,128)S(1)}', space=vmem, size = 0x200, scoped, tag = 'scoped memory for _lambda_.1']
  %s0 = inlined_call_operand.vmem [shape: bf16[6,1024], index: 0, kind: input, shape index: {}]
  %s1 = inlined_call_operand.hbm [shape: bf16[32,6], index: 1, kind: input, shape index: {}]
  %s2 = inlined_call_operand.hbm [shape: bf16[32,1], index: 2, kind: input, shape index: {}]
  %s3 = inlined_call_operand.vmem [shape: bf16[64,32], index: 3, kind: input, shape index: {}]
  %s4 = inlined_call_operand.vmem [shape: bf16[64,1], index: 4, kind: input, shape index: {}]
  %s5 = inlined_call_operand.vmem [shape: bf16[64,64], index: 5, kind: input, shape index: {}]
  %s6 = inlined_call_operand.vmem [shape: bf16[64,1], index: 6, kind: input, shape index: {}]
  %s7 = inlined_call_operand.hbm [shape: bf16[32,64], index: 7, kind: input, shape index: {}]
  %s8 = inlined_call_operand.vmem [shape: f32[32,1], index: 8, kind: input, shape index: {}]
  %s9 = inlined_call_operand.hbm [shape: f32[32,1], index: 9, kind: input, shape index: {}]
  %s10 = inlined_call_operand.<no memory space> [shape: f32[1,1], index: 10, kind: input, shape index: {}]
  %s11 = inlined_call_operand.vmem [shape: f32[1,1024], index: 11, kind: output, shape index: {}]
  %s12 = sld [smem:[#allocation0]]
  $region93: #{_lambda_.1} parent=0
    _
  %s14 = ssub.s32 1, %s12
  %s15 = scalar_select 0, %s14, %s12
  %v16 = vstv %s10
  %17 = vst [vmem:[#allocation2] sm:$0x1] %v16
  $region1: #{_lambda_.1} parent=0
    #allocation3 [shape = 'u8[8192]{0}', space=vmem, size = 0x2000, scoped, tag = 'input window, operand 1, single buffered']
    #allocation4 [shape = 's32[2]{0}', space=sflag, size = 0x8, scoped, tag = 'scoped memory for _lambda_.1']
    #allocation5 [shape = 'u8[8192]{0}', space=vmem, size = 0x2000, scoped, tag = 'input window, operand 2, single buffered']
    #allocation6 [shape = 's32[1]{0}', space=sflag, size = 0x4, scoped, tag = 'scoped memory for _lambda_.1']
    #allocation7 [shape = 'u8[8192]{0}', space=vmem, size = 0x2000, scoped, tag = 'input window, operand 7, single buffered']
    #allocation8 [shape = 'u8[16384]{0}', space=vmem, size = 0x4000, scoped, tag = 'input window, operand 9, single buffered']
    #allocation9 [shape = 's32[1]{0}', space=sflag, size = 0x4, scoped, tag = 'scoped memory for _lambda_.1']
    %18 = vsyncpa [#allocation4], 0
    %19 = vsyncpa [#allocation6], 0
    %20 = vsyncpa [#allocation9], 0
    loop: start=0, step=1, limit=4
    $region2: #{_lambda_.1} parent=1 // loop_pre_header
      _
    $region3: #{_lambda_.1} parent=1 // loop_header
      %s22 = sphi 0, %s26
      %p23 = scmp.ge.s32.totalorder %s22, 4
      %s32 = sphi 0, %s34
      %s35 = sphi 0, %s32
      %s36 = sphi 0, %s35
      %s52 = sphi 0, %s36
      %s56 = sphi 0, %s56
      %s58 = sphi 0, %s56
      %s59 = sphi 0, %s58
      %s73 = sphi 0, %s59
      %s77 = sphi 0, %s77
      %s79 = sphi 0, %s77
      %s80 = sphi 0, %s79
      %s94 = sphi 0, %s80
      %s98 = sphi 0, %s98
      %s100 = sphi 0, %s98
      %s101 = sphi 0, %s100
      %s115 = sphi 0, %s101
      %s119 = sphi 0, %s119
      %s121 = sphi 0, %s119
      %s122 = sphi 0, %s121
      %s136 = sphi 0, %s122
      %s140 = sphi 0, %s140
      %s142 = sphi 0, %s140
      %s143 = sphi 0, %s142
      %s157 = sphi 0, %s143
      %s161 = sphi 0, %s161
      %s163 = sphi 0, %s161
      %s164 = sphi 0, %s163
      %s178 = sphi 0, %s164
      %s182 = sphi 0, %s182
      %s184 = sphi 0, %s182
      %s185 = sphi 0, %s184
      %s199 = sphi 0, %s185
      %s203 = sphi 0, %s203
      %s205 = sphi 0, %s203
      %s206 = sphi 0, %s205
      %s220 = sphi 0, %s206
      %s224 = sphi 0, %s224
      %s226 = sphi 0, %s224
      %s227 = sphi 0, %s226
      %s241 = sphi 0, %s227
      %s245 = sphi 0, %s245
      %s247 = sphi 0, %s245
      %s248 = sphi 0, %s247
      %s262 = sphi 0, %s248
      %s268 = sphi 0, %s270
      %s271 = sphi 0, %s268
      %s272 = sphi 0, %s271
      %s288 = sphi 0, %s272
    $region4: #{_lambda_.1} parent=1 // loop_header_branch
      %25 = sbr.rel (%p23) target = $region8
    $region5: #{_lambda_.1} parent=1 // loop_body
      %s27 = ssub.s32 %s22, 1
      %s28 = ssub.s32 %s22, 2
      %s29 = sadd.s32 %s22, 1
      %s30 = ssub.s32 %s22, %s29
      %p31 = scmp.eq.s32.totalorder %s30, 0
      %s33 = sadd.s32 %s32, 1
      %s34 = scalar_select %p31, %s32, %s33
      %p37 = pneg %p31
      %p38 = scmp.eq.s32.totalorder %s22, 1
      %p39 = por %p37, %p38
      %p40 = scmp.ne.s32.totalorder %s32, %s35
      %p41 = scmp.eq.s32.totalorder %s22, 0
      %p42 = por %p40, %p41
      %p43 = scmp.ne.s32.totalorder %s32, %s35
      %p44 = scmp.eq.s32.totalorder %s27, 1
      %p45 = por %p43, %p44
      %p46 = scmp.ne.s32.totalorder %s35, %s36
      %p47 = scmp.eq.s32.totalorder %s27, 0
      %p48 = por %p46, %p47
      %p49 = scmp.ne.s32.totalorder %s35, %s36
      %p50 = scmp.eq.s32.totalorder %s28, 1
      %p51 = por %p49, %p50
      %p53 = scmp.ne.s32.totalorder %s36, %s52
      %p54 = scmp.eq.s32.totalorder %s28, 0
      %p55 = por %p53, %p54
      %s57 = sadd.s32 %s56, 1
      %p60 = scmp.eq.s32.totalorder %s22, 1
      %p61 = scmp.ne.s32.totalorder %s56, %s58
      %p62 = scmp.eq.s32.totalorder %s22, 0
      %p63 = por %p61, %p62
      %p64 = scmp.ne.s32.totalorder %s56, %s58
      %p65 = scmp.eq.s32.totalorder %s27, 1
      %p66 = por %p64, %p65
      %p67 = scmp.ne.s32.totalorder %s58, %s59
      %p68 = scmp.eq.s32.totalorder %s27, 0
      %p69 = por %p67, %p68
      %p70 = scmp.ne.s32.totalorder %s58, %s59
      %p71 = scmp.eq.s32.totalorder %s28, 1
      %p72 = por %p70, %p71
      %p74 = scmp.ne.s32.totalorder %s59, %s73
      %p75 = scmp.eq.s32.totalorder %s28, 0
      %p76 = por %p74, %p75
      %s78 = sadd.s32 %s77, 1
      %p81 = scmp.eq.s32.totalorder %s22, 1
      %p82 = scmp.ne.s32.totalorder %s77, %s79
      %p83 = scmp.eq.s32.totalorder %s22, 0
      %p84 = por %p82, %p83
      %p85 = scmp.ne.s32.totalorder %s77, %s79
      %p86 = scmp.eq.s32.totalorder %s27, 1
      %p87 = por %p85, %p86
      %p88 = scmp.ne.s32.totalorder %s79, %s80
      %p89 = scmp.eq.s32.totalorder %s27, 0
      %p90 = por %p88, %p89
      %p91 = scmp.ne.s32.totalorder %s79, %s80
      %p92 = scmp.eq.s32.totalorder %s28, 1
      %p93 = por %p91, %p92
      %p95 = scmp.ne.s32.totalorder %s80, %s94
      %p96 = scmp.eq.s32.totalorder %s28, 0
      %p97 = por %p95, %p96
      %s99 = sadd.s32 %s98, 1
      %p102 = scmp.eq.s32.totalorder %s22, 1
      %p103 = scmp.ne.s32.totalorder %s98, %s100
      %p104 = scmp.eq.s32.totalorder %s22, 0
      %p105 = por %p103, %p104
      %p106 = scmp.ne.s32.totalorder %s98, %s100
      %p107 = scmp.eq.s32.totalorder %s27, 1
      %p108 = por %p106, %p107
      %p109 = scmp.ne.s32.totalorder %s100, %s101
      %p110 = scmp.eq.s32.totalorder %s27, 0
      %p111 = por %p109, %p110
      %p112 = scmp.ne.s32.totalorder %s100, %s101
      %p113 = scmp.eq.s32.totalorder %s28, 1
      %p114 = por %p112, %p113
      %p116 = scmp.ne.s32.totalorder %s101, %s115
      %p117 = scmp.eq.s32.totalorder %s28, 0
      %p118 = por %p116, %p117
      %s120 = sadd.s32 %s119, 1
      %p123 = scmp.eq.s32.totalorder %s22, 1
      %p124 = scmp.ne.s32.totalorder %s119, %s121
      %p125 = scmp.eq.s32.totalorder %s22, 0
      %p126 = por %p124, %p125
      %p127 = scmp.ne.s32.totalorder %s119, %s121
      %p128 = scmp.eq.s32.totalorder %s27, 1
      %p129 = por %p127, %p128
      %p130 = scmp.ne.s32.totalorder %s121, %s122
      %p131 = scmp.eq.s32.totalorder %s27, 0
      %p132 = por %p130, %p131
      %p133 = scmp.ne.s32.totalorder %s121, %s122
      %p134 = scmp.eq.s32.totalorder %s28, 1
      %p135 = por %p133, %p134
      %p137 = scmp.ne.s32.totalorder %s122, %s136
      %p138 = scmp.eq.s32.totalorder %s28, 0
      %p139 = por %p137, %p138
      %s141 = sadd.s32 %s140, 1
      %p144 = scmp.eq.s32.totalorder %s22, 1
      %p145 = scmp.ne.s32.totalorder %s140, %s142
      %p146 = scmp.eq.s32.totalorder %s22, 0
      %p147 = por %p145, %p146
      %p148 = scmp.ne.s32.totalorder %s140, %s142
      %p149 = scmp.eq.s32.totalorder %s27, 1
      %p150 = por %p148, %p149
      %p151 = scmp.ne.s32.totalorder %s142, %s143
      %p152 = scmp.eq.s32.totalorder %s27, 0
      %p153 = por %p151, %p152
      %p154 = scmp.ne.s32.totalorder %s142, %s143
      %p155 = scmp.eq.s32.totalorder %s28, 1
      %p156 = por %p154, %p155
      %p158 = scmp.ne.s32.totalorder %s143, %s157
      %p159 = scmp.eq.s32.totalorder %s28, 0
      %p160 = por %p158, %p159
      %s162 = sadd.s32 %s161, 1
      %p165 = scmp.eq.s32.totalorder %s22, 1
      %p166 = scmp.ne.s32.totalorder %s161, %s163
      %p167 = scmp.eq.s32.totalorder %s22, 0
      %p168 = por %p166, %p167
      %p169 = scmp.ne.s32.totalorder %s161, %s163
      %p170 = scmp.eq.s32.totalorder %s27, 1
      %p171 = por %p169, %p170
      %p172 = scmp.ne.s32.totalorder %s163, %s164
      %p173 = scmp.eq.s32.totalorder %s27, 0
      %p174 = por %p172, %p173
      %p175 = scmp.ne.s32.totalorder %s163, %s164
      %p176 = scmp.eq.s32.totalorder %s28, 1
      %p177 = por %p175, %p176
      %p179 = scmp.ne.s32.totalorder %s164, %s178
      %p180 = scmp.eq.s32.totalorder %s28, 0
      %p181 = por %p179, %p180
      %s183 = sadd.s32 %s182, 1
      %p186 = scmp.eq.s32.totalorder %s22, 1
      %p187 = scmp.ne.s32.totalorder %s182, %s184
      %p188 = scmp.eq.s32.totalorder %s22, 0
      %p189 = por %p187, %p188
      %p190 = scmp.ne.s32.totalorder %s182, %s184
      %p191 = scmp.eq.s32.totalorder %s27, 1
      %p192 = por %p190, %p191
      %p193 = scmp.ne.s32.totalorder %s184, %s185
      %p194 = scmp.eq.s32.totalorder %s27, 0
      %p195 = por %p193, %p194
      %p196 = scmp.ne.s32.totalorder %s184, %s185
      %p197 = scmp.eq.s32.totalorder %s28, 1
      %p198 = por %p196, %p197
      %p200 = scmp.ne.s32.totalorder %s185, %s199
      %p201 = scmp.eq.s32.totalorder %s28, 0
      %p202 = por %p200, %p201
      %s204 = sadd.s32 %s203, 1
      %p207 = scmp.eq.s32.totalorder %s22, 1
      %p208 = scmp.ne.s32.totalorder %s203, %s205
      %p209 = scmp.eq.s32.totalorder %s22, 0
      %p210 = por %p208, %p209
      %p211 = scmp.ne.s32.totalorder %s203, %s205
      %p212 = scmp.eq.s32.totalorder %s27, 1
      %p213 = por %p211, %p212
      %p214 = scmp.ne.s32.totalorder %s205, %s206
      %p215 = scmp.eq.s32.totalorder %s27, 0
      %p216 = por %p214, %p215
      %p217 = scmp.ne.s32.totalorder %s205, %s206
      %p218 = scmp.eq.s32.totalorder %s28, 1
      %p219 = por %p217, %p218
      %p221 = scmp.ne.s32.totalorder %s206, %s220
      %p222 = scmp.eq.s32.totalorder %s28, 0
      %p223 = por %p221, %p222
      %s225 = sadd.s32 %s224, 1
      %p228 = scmp.eq.s32.totalorder %s22, 1
      %p229 = scmp.ne.s32.totalorder %s224, %s226
      %p230 = scmp.eq.s32.totalorder %s22, 0
      %p231 = por %p229, %p230
      %p232 = scmp.ne.s32.totalorder %s224, %s226
      %p233 = scmp.eq.s32.totalorder %s27, 1
      %p234 = por %p232, %p233
      %p235 = scmp.ne.s32.totalorder %s226, %s227
      %p236 = scmp.eq.s32.totalorder %s27, 0
      %p237 = por %p235, %p236
      %p238 = scmp.ne.s32.totalorder %s226, %s227
      %p239 = scmp.eq.s32.totalorder %s28, 1
      %p240 = por %p238, %p239
      %p242 = scmp.ne.s32.totalorder %s227, %s241
      %p243 = scmp.eq.s32.totalorder %s28, 0
      %p244 = por %p242, %p243
      %s246 = sadd.s32 %s245, 1
      %p249 = scmp.eq.s32.totalorder %s22, 1
      %p250 = scmp.ne.s32.totalorder %s245, %s247
      %p251 = scmp.eq.s32.totalorder %s22, 0
      %p252 = por %p250, %p251
      %p253 = scmp.ne.s32.totalorder %s245, %s247
      %p254 = scmp.eq.s32.totalorder %s27, 1
      %p255 = por %p253, %p254
      %p256 = scmp.ne.s32.totalorder %s247, %s248
      %p257 = scmp.eq.s32.totalorder %s27, 0
      %p258 = por %p256, %p257
      %p259 = scmp.ne.s32.totalorder %s247, %s248
      %p260 = scmp.eq.s32.totalorder %s28, 1
      %p261 = por %p259, %p260
      %p263 = scmp.ne.s32.totalorder %s248, %s262
      %p264 = scmp.eq.s32.totalorder %s28, 0
      %p265 = por %p263, %p264
      %s266 = ssub.s32 %s22, %s29
      %p267 = scmp.eq.s32.totalorder %s266, 0
      %s269 = sadd.s32 %s268, 1
      %s270 = scalar_select %p267, %s268, %s269
      %p273 = pneg %p267
      %p274 = scmp.eq.s32.totalorder %s22, 1
      %p275 = por %p273, %p274
      %p276 = scmp.ne.s32.totalorder %s268, %s271
      %p277 = scmp.eq.s32.totalorder %s22, 0
      %p278 = por %p276, %p277
      %p279 = scmp.ne.s32.totalorder %s268, %s271
      %p280 = scmp.eq.s32.totalorder %s27, 1
      %p281 = por %p279, %p280
      %p282 = scmp.ne.s32.totalorder %s271, %s272
      %p283 = scmp.eq.s32.totalorder %s27, 0
      %p284 = por %p282, %p283
      %p285 = scmp.ne.s32.totalorder %s271, %s272
      %p286 = scmp.eq.s32.totalorder %s28, 1
      %p287 = por %p285, %p286
      %p289 = scmp.ne.s32.totalorder %s272, %s288
      %p290 = scmp.eq.s32.totalorder %s28, 0
      %p291 = por %p289, %p290
      %p292 = scmp.le.s32.totalorder 1, %s22
      %p293 = scmp.lt.s32.totalorder %s22, 3
      %p294 = pnand %p292, %p293
      %p295 = pneg %p294
      // Predicated region
      $region9: #{_lambda_.1} parent=5 // pred_check
        _
      $region10: #{_lambda_.1} parent=5 // pred_check_branch
        %297 = sbr.rel (%p294) target = $region12
      $region11: #{_lambda_.1} parent=5 // pred_region
        %s298 = ssub.s32 %s22, 1
        // Predicated region
        $region13: #{_lambda_.1} parent=11 // pred_check
          %p299 = pneg %p69
        $region14: #{_lambda_.1} parent=11 // pred_check_branch
          %301 = sbr.rel (%p299) target = $region16
        $region15: #{_lambda_.1} parent=11 // pred_region
          %303 = vsyncadd [#allocation4], 0
          %s304 = sshll.u32 %s1, 4
          %s305 = int_to_ptr.hbm [resolvable:$true] %s304
          %s306 = sshll.u32 [#allocation3], 4
          %s307 = int_to_ptr.vmem [resolvable:$true] %s306
          %312 = dma.hbm_to_vmem [thread:$0]  %s305, 256, %s307, [#allocation4], 64, 64, 4
        $region16: #{_lambda_.1} parent=11 // pred_fallthru
          _
        // Predicated region
        $region17: #{_lambda_.1} parent=11 // pred_check
          %p313 = pneg %p90
        $region18: #{_lambda_.1} parent=11 // pred_check_branch
          %315 = sbr.rel (%p313) target = $region20
        $region19: #{_lambda_.1} parent=11 // pred_region
          %317 = vsyncadd [#allocation6], 0
          %s318 = sshll.u32 %s2, 4
          %s319 = int_to_ptr.hbm [resolvable:$true] %s318
          %s320 = sshll.u32 [#allocation5], 4
          %s321 = int_to_ptr.vmem [resolvable:$true] %s320
          %326 = dma.hbm_to_vmem [thread:$0]  %s319, 256, %s321, [#allocation6], 64, 64, 4
        $region20: #{_lambda_.1} parent=11 // pred_fallthru
          _
        // Predicated region
        $region21: #{_lambda_.1} parent=11 // pred_check
          %p327 = pneg %p111
        $region22: #{_lambda_.1} parent=11 // pred_check_branch
          %329 = sbr.rel (%p327) target = $region24
        $region23: #{_lambda_.1} parent=11 // pred_region
          _
        $region24: #{_lambda_.1} parent=11 // pred_fallthru
          _
        // Predicated region
        $region25: #{_lambda_.1} parent=11 // pred_check
          %p330 = pneg %p132
        $region26: #{_lambda_.1} parent=11 // pred_check_branch
          %332 = sbr.rel (%p330) target = $region28
        $region27: #{_lambda_.1} parent=11 // pred_region
          _
        $region28: #{_lambda_.1} parent=11 // pred_fallthru
          _
        // Predicated region
        $region29: #{_lambda_.1} parent=11 // pred_check
          %p333 = pneg %p153
        $region30: #{_lambda_.1} parent=11 // pred_check_branch
          %335 = sbr.rel (%p333) target = $region32
        $region31: #{_lambda_.1} parent=11 // pred_region
          _
        $region32: #{_lambda_.1} parent=11 // pred_fallthru
          _
        // Predicated region
        $region33: #{_lambda_.1} parent=11 // pred_check
          %p336 = pneg %p174
        $region34: #{_lambda_.1} parent=11 // pred_check_branch
          %338 = sbr.rel (%p336) target = $region36
        $region35: #{_lambda_.1} parent=11 // pred_region
          _
        $region36: #{_lambda_.1} parent=11 // pred_fallthru
          _
        // Predicated region
        $region37: #{_lambda_.1} parent=11 // pred_check
          %p339 = pneg %p195
        $region38: #{_lambda_.1} parent=11 // pred_check_branch
          %341 = sbr.rel (%p339) target = $region40
        $region39: #{_lambda_.1} parent=11 // pred_region
          %343 = vsyncadd [#allocation6], 0
          %s344 = sshll.u32 %s7, 4
          %s345 = int_to_ptr.hbm [resolvable:$true] %s344
          %s346 = sshll.u32 [#allocation7], 4
          %s347 = int_to_ptr.vmem [resolvable:$true] %s346
          %352 = dma.hbm_to_vmem [thread:$0]  %s345, 256, %s347, [#allocation6], 64, 64, 4
        $region40: #{_lambda_.1} parent=11 // pred_fallthru
          _
        // Predicated region
        $region41: #{_lambda_.1} parent=11 // pred_check
          %p353 = pneg %p216
        $region42: #{_lambda_.1} parent=11 // pred_check_branch
          %355 = sbr.rel (%p353) target = $region44
        $region43: #{_lambda_.1} parent=11 // pred_region
          _
        $region44: #{_lambda_.1} parent=11 // pred_fallthru
          _
        // Predicated region
        $region45: #{_lambda_.1} parent=11 // pred_check
          %p356 = pneg %p237
        $region46: #{_lambda_.1} parent=11 // pred_check_branch
          %358 = sbr.rel (%p356) target = $region48
        $region47: #{_lambda_.1} parent=11 // pred_region
          %360 = vsyncadd [#allocation9], 0
          %s361 = sshll.u32 %s9, 4
          %s362 = int_to_ptr.hbm [resolvable:$true] %s361
          %s363 = sshll.u32 [#allocation8], 4
          %s364 = int_to_ptr.vmem [resolvable:$true] %s363
          %369 = dma.hbm_to_vmem [thread:$0]  %s362, 512, %s364, [#allocation9], 128, 128, 8
        $region48: #{_lambda_.1} parent=11 // pred_fallthru
          _
        // Predicated region
        $region49: #{_lambda_.1} parent=11 // pred_check
          %p370 = pneg %p258
        $region50: #{_lambda_.1} parent=11 // pred_check_branch
          %372 = sbr.rel (%p370) target = $region52
        $region51: #{_lambda_.1} parent=11 // pred_region
          _
        $region52: #{_lambda_.1} parent=11 // pred_fallthru
          _
      $region12: #{_lambda_.1} parent=5 // pred_fallthru
        _
      %p373 = scmp.lt.s32.totalorder %s22, 2
      // Predicated region
      $region53: #{_lambda_.1} parent=5 // pred_check
        %p374 = pneg %p373
      $region54: #{_lambda_.1} parent=5 // pred_check_branch
        %376 = sbr.rel (%p374) target = $region56
      $region55: #{_lambda_.1} parent=5 // pred_region
        // Predicated region
        $region57: #{_lambda_.1} parent=55 // pred_check
          %p377 = pneg %p42
        $region58: #{_lambda_.1} parent=55 // pred_check_branch
          %379 = sbr.rel (%p377) target = $region60
        $region59: #{_lambda_.1} parent=55 // pred_region
          %s380 = smul.u32 4, %s22
          %p381 = scmp.lt.s32.totalorder %s380, 7
          %s382 = scalar_select %p381, %s380, 7
          %s383 = smul.addr %s382, 4
          %s384 = scalar_lea.vmem %s0, %s383
          %s385 = smul.u32 4, %s22
        $region60: #{_lambda_.1} parent=55 // pred_fallthru
          _
      $region56: #{_lambda_.1} parent=5 // pred_fallthru
        _
      %p386 = scmp.le.s32.totalorder 1, %s22
      %p387 = scmp.lt.s32.totalorder %s22, 3
      %p388 = pnand %p386, %p387
      %p389 = pneg %p388
      // Predicated region
      $region61: #{_lambda_.1} parent=5 // pred_check
        _
      $region62: #{_lambda_.1} parent=5 // pred_check_branch
        %391 = sbr.rel (%p388) target = $region64
      $region63: #{_lambda_.1} parent=5 // pred_region
        %s392 = ssub.s32 %s22, 1
        // Predicated region
        $region65: #{_lambda_.1} parent=63 // pred_check
          %p393 = pneg %p69
        $region66: #{_lambda_.1} parent=63 // pred_check_branch
          %395 = sbr.rel (%p393) target = $region68
        $region67: #{_lambda_.1} parent=63 // pred_region
          %397 = dma.done [#allocation4], 256
        $region68: #{_lambda_.1} parent=63 // pred_fallthru
          _
        // Predicated region
        $region69: #{_lambda_.1} parent=63 // pred_check
          %p398 = pneg %p90
        $region70: #{_lambda_.1} parent=63 // pred_check_branch
          %400 = sbr.rel (%p398) target = $region72
        $region71: #{_lambda_.1} parent=63 // pred_region
          %402 = dma.done [#allocation6], 256
        $region72: #{_lambda_.1} parent=63 // pred_fallthru
          _
        // Predicated region
        $region73: #{_lambda_.1} parent=63 // pred_check
          %p403 = pneg %p195
        $region74: #{_lambda_.1} parent=63 // pred_check_branch
          %405 = sbr.rel (%p403) target = $region76
        $region75: #{_lambda_.1} parent=63 // pred_region
          %407 = dma.done [#allocation6], 256
        $region76: #{_lambda_.1} parent=63 // pred_fallthru
          _
        // Predicated region
        $region77: #{_lambda_.1} parent=63 // pred_check
          %p408 = pneg %p237
        $region78: #{_lambda_.1} parent=63 // pred_check_branch
          %410 = sbr.rel (%p408) target = $region80
        $region79: #{_lambda_.1} parent=63 // pred_region
          %412 = dma.done [#allocation9], 512
        $region80: #{_lambda_.1} parent=63 // pred_fallthru
          _
        %s413 = smul.u32 4, %s27
        %p414 = scmp.lt.s32.totalorder %s413, 7
        %s415 = scalar_select %p414, %s413, 7
        %s416 = smul.addr %s415, 4
        %s417 = scalar_lea.vmem %s0, %s416
        %p418 = pneg %p48
        %p419 = pneg %p45
        %p420 = pneg %p69
        %p421 = pneg %p66
        %p422 = pneg %p90
        %p423 = pneg %p87
        %p424 = pneg %p111
        %p425 = pneg %p108
        %p426 = pneg %p132
        %p427 = pneg %p129
        %p428 = pneg %p153
        %p429 = pneg %p150
        %p430 = pneg %p174
        %p431 = pneg %p171
        %p432 = pneg %p195
        %p433 = pneg %p192
        %p434 = pneg %p216
        %p435 = pneg %p213
        %p436 = pneg %p237
        %p437 = pneg %p234
        %p438 = pneg %p258
        %p439 = pneg %p255
        %p440 = pneg %p284
        %p441 = pneg %p281
        %s442 = smul.u32 4, %s27
        %p443 = scmp.lt.s32.totalorder %s442, 7
        %s444 = scalar_select %p443, %s442, 7
        %s445 = scalar_lea.vmem %s11, %s444
        %s446 = smul.u32 4, %s27
        %p447 = scmp.lt.s32.totalorder %s446, 7
        %s448 = scalar_select %p447, %s446, 7
        %s449 = smul.addr %s448, 4
        %s450 = scalar_lea.vmem %s0, %s449
        %s451 = smul.u32 4, %s27
        %s452 = smul.u32 4, %s27
        %p453 = scmp.lt.s32.totalorder %s452, 7
        %s454 = scalar_select %p453, %s452, 7
        %s455 = scalar_lea.vmem %s11, %s454
        %s456 = smul.u32 4, %s27
        %v458 = vld [vmem:[%s450] sm:$0x77]
        %v459 = vld [vmem:[%s450 + $0x8] sm:$0x77]
        %v460 = vld [vmem:[#allocation3] sm:$0xf]
        %v461 = vld [vmem:[#allocation3 + $0x4] sm:$0xf]
        %v462 = vld [vmem:[#allocation3 + $0x8] sm:$0xf]
        %v463 = vld [vmem:[#allocation3 + $0xc] sm:$0xf]
        %v468 = vunpack.c.l.b16 %v460
        %v469 = vunpack.c.l.b16 %v461
        %v470 = vunpack.c.l.b16 %v462
        %v471 = vunpack.c.l.b16 %v463
        %v472 = vpack.c.b16 %v469, %v468
        %v473 = vpack.c.b16 %v471, %v470
        %v476 = vunpack.c.l.b16 %v458
        %v477 = vunpack.c.h.b16 %v458
        %v478 = vunpack.c.l.b16 %v459
        %v479 = vunpack.c.h.b16 %v459
        %v480 = vpack.c.b16 %v476, %v476
        %v481 = vpack.c.b16 %v477, %v477
        %v482 = vpack.c.b16 %v478, %v478
        %v483 = vpack.c.b16 %v479, %v479
        %vm484 = vcmask 48128
        %v486 = vsel %vm484, %v472, 0
        %v489 = vsel %vm484, %v473, 0
        %vm491 = vcmask 1042432
        %v493 = vsel %vm491, %v480, 0
        %v496 = vsel %vm491, %v481, 0
        %v499 = vsel %vm491, %v482, 0
        %v502 = vsel %vm491, %v483, 0
        %504 = vmatpush.bf16.msra.mxu0 0
        %505 = vmatpush.bf16.msra.mxu0 0
        %506 = vmatpush.bf16.msra.mxu0 0
        %507 = vmatpush.bf16.msra.mxu0 0
        %508 = vmatpush.bf16.msra.mxu0 0
        %509 = vmatpush.bf16.msra.mxu0 0
        %510 = vmatpush.bf16.msra.mxu0 0
        %511 = vmatpush.bf16.msra.mxu0 %v493
        %512 = vmatmul.bf16.gmra.mxu0 %v486
        %v513 = vpop.f32.mrf.mxu0
        %v514 = vadd.f32 0.0, %v513
        %v515 = vpop.f32.mrf.mxu0
        %v516 = vadd.f32 0.0, %v515
        %517 = vmatmul.bf16.gmra.mxu0 %v489
        %v518 = vpop.f32.mrf.mxu0
        %v519 = vadd.f32 0.0, %v518
        %v520 = vpop.f32.mrf.mxu0
        %v521 = vadd.f32 0.0, %v520
        %522 = vdwg.mxu0
        %523 = vmatpush.bf16.msra.mxu0 0
        %524 = vmatpush.bf16.msra.mxu0 0
        %525 = vmatpush.bf16.msra.mxu0 0
        %526 = vmatpush.bf16.msra.mxu0 0
        %527 = vmatpush.bf16.msra.mxu0 0
        %528 = vmatpush.bf16.msra.mxu0 0
        %529 = vmatpush.bf16.msra.mxu0 0
        %530 = vmatpush.bf16.msra.mxu0 %v496
        %531 = vmatmul.bf16.gmra.mxu0 %v486
        %v532 = vpop.f32.mrf.mxu0
        %v533 = vadd.f32 0.0, %v532
        %v534 = vpop.f32.mrf.mxu0
        %v535 = vadd.f32 0.0, %v534
        %536 = vmatmul.bf16.gmra.mxu0 %v489
        %v537 = vpop.f32.mrf.mxu0
        %v538 = vadd.f32 0.0, %v537
        %v539 = vpop.f32.mrf.mxu0
        %v540 = vadd.f32 0.0, %v539
        %541 = vdwg.mxu0
        %542 = vmatpush.bf16.msra.mxu0 0
        %543 = vmatpush.bf16.msra.mxu0 0
        %544 = vmatpush.bf16.msra.mxu0 0
        %545 = vmatpush.bf16.msra.mxu0 0
        %546 = vmatpush.bf16.msra.mxu0 0
        %547 = vmatpush.bf16.msra.mxu0 0
        %548 = vmatpush.bf16.msra.mxu0 0
        %549 = vmatpush.bf16.msra.mxu0 %v499
        %550 = vmatmul.bf16.gmra.mxu0 %v486
        %v551 = vpop.f32.mrf.mxu0
        %v552 = vadd.f32 0.0, %v551
        %v553 = vpop.f32.mrf.mxu0
        %v554 = vadd.f32 0.0, %v553
        %555 = vmatmul.bf16.gmra.mxu0 %v489
        %v556 = vpop.f32.mrf.mxu0
        %v557 = vadd.f32 0.0, %v556
        %v558 = vpop.f32.mrf.mxu0
        %v559 = vadd.f32 0.0, %v558
        %560 = vdwg.mxu0
        %561 = vmatpush.bf16.msra.mxu0 0
        %562 = vmatpush.bf16.msra.mxu0 0
        %563 = vmatpush.bf16.msra.mxu0 0
        %564 = vmatpush.bf16.msra.mxu0 0
        %565 = vmatpush.bf16.msra.mxu0 0
        %566 = vmatpush.bf16.msra.mxu0 0
        %567 = vmatpush.bf16.msra.mxu0 0
        %568 = vmatpush.bf16.msra.mxu0 %v502
        %569 = vmatmul.bf16.gmra.mxu0 %v486
        %v570 = vpop.f32.mrf.mxu0
        %v571 = vadd.f32 0.0, %v570
        %v572 = vpop.f32.mrf.mxu0
        %v573 = vadd.f32 0.0, %v572
        %574 = vmatmul.bf16.gmra.mxu0 %v489
        %v575 = vpop.f32.mrf.mxu0
        %v576 = vadd.f32 0.0, %v575
        %v577 = vpop.f32.mrf.mxu0
        %v578 = vadd.f32 0.0, %v577
        %579 = vdwg.mxu0
        %v580 = vpack.c.bf16 %v533, %v514
        %v581 = vpack.c.bf16 %v571, %v552
        %v582 = vpack.c.bf16 %v535, %v516
        %v583 = vpack.c.bf16 %v573, %v554
        %v584 = vpack.c.bf16 %v538, %v519
        %v585 = vpack.c.bf16 %v576, %v557
        %v586 = vpack.c.bf16 %v540, %v521
        %v587 = vpack.c.bf16 %v578, %v559
        %v588 = vld [vmem:[#allocation5] sm:$0xf]
        %v589 = vld [vmem:[#allocation5 + $0x4] sm:$0xf]
        %v590 = vld [vmem:[#allocation5 + $0x8] sm:$0xf]
        %v591 = vld [vmem:[#allocation5 + $0xc] sm:$0xf]
        %593 = vset.pattern.permute.xlu0 0
        %594 = vperm.xlu0 %593, %v588
        %v595 = vpop.permute.xlu0 %594
        %v598 = vunpack.c.l.s4 839922192
        %v599 = vunpack.c.0.s8 %v598
        %v600 = vperm.slane %v595, %v599
        %602 = vset.pattern.permute.xlu0 0
        %603 = vperm.xlu0 %602, %v589
        %v604 = vpop.permute.xlu0 %603
        %v607 = vunpack.c.l.s4 839922192
        %v608 = vunpack.c.0.s8 %v607
        %v609 = vperm.slane %v604, %v608
        %611 = vset.pattern.permute.xlu0 0
        %612 = vperm.xlu0 %611, %v590
        %v613 = vpop.permute.xlu0 %612
        %v616 = vunpack.c.l.s4 839922192
        %v617 = vunpack.c.0.s8 %v616
        %v618 = vperm.slane %v613, %v617
        %620 = vset.pattern.permute.xlu0 0
        %621 = vperm.xlu0 %620, %v591
        %v622 = vpop.permute.xlu0 %621
        %v625 = vunpack.c.l.s4 839922192
        %v626 = vunpack.c.0.s8 %v625
        %v627 = vperm.slane %v622, %v626
        %v628 = vunpack.c.l.bf16 %v580
        %v629 = vunpack.c.h.bf16 %v580
        %v630 = vunpack.c.l.bf16 %v581
        %v631 = vunpack.c.h.bf16 %v581
        %v632 = vunpack.c.l.bf16 %v582
        %v633 = vunpack.c.h.bf16 %v582
        %v634 = vunpack.c.l.bf16 %v583
        %v635 = vunpack.c.h.bf16 %v583
        %v636 = vunpack.c.l.bf16 %v584
        %v637 = vunpack.c.h.bf16 %v584
        %v638 = vunpack.c.l.bf16 %v585
        %v639 = vunpack.c.h.bf16 %v585
        %v640 = vunpack.c.l.bf16 %v586
        %v641 = vunpack.c.h.bf16 %v586
        %v642 = vunpack.c.l.bf16 %v587
        %v643 = vunpack.c.h.bf16 %v587
        %v644 = vunpack.c.l.bf16 %v600
        %v645 = vunpack.c.l.bf16 %v609
        %v646 = vunpack.c.l.bf16 %v618
        %v647 = vunpack.c.l.bf16 %v627
        %v648 = vadd.f32 %v628, %v644
        %v649 = vadd.f32 %v629, %v644
        %v650 = vadd.f32 %v630, %v644
        %v651 = vadd.f32 %v631, %v644
        %v652 = vadd.f32 %v632, %v645
        %v653 = vadd.f32 %v633, %v645
        %v654 = vadd.f32 %v634, %v645
        %v655 = vadd.f32 %v635, %v645
        %v656 = vadd.f32 %v636, %v646
        %v657 = vadd.f32 %v637, %v646
        %v658 = vadd.f32 %v638, %v646
        %v659 = vadd.f32 %v639, %v646
        %v660 = vadd.f32 %v640, %v647
        %v661 = vadd.f32 %v641, %v647
        %v662 = vadd.f32 %v642, %v647
        %v663 = vadd.f32 %v643, %v647
        %v664 = vpack.c.bf16 %v649, %v648
        %v665 = vpack.c.bf16 %v651, %v650
        %v666 = vpack.c.bf16 %v653, %v652
        %v667 = vpack.c.bf16 %v655, %v654
        %v668 = vpack.c.bf16 %v657, %v656
        %v669 = vpack.c.bf16 %v659, %v658
        %v670 = vpack.c.bf16 %v661, %v660
        %v671 = vpack.c.bf16 %v663, %v662
        %v672 = vunpack.c.l.bf16 %v664
        %v673 = vunpack.c.h.bf16 %v664
        %v674 = vunpack.c.l.bf16 %v665
        %v675 = vunpack.c.h.bf16 %v665
        %v676 = vunpack.c.l.bf16 %v666
        %v677 = vunpack.c.h.bf16 %v666
        %v678 = vunpack.c.l.bf16 %v667
        %v679 = vunpack.c.h.bf16 %v667
        %v680 = vunpack.c.l.bf16 %v668
        %v681 = vunpack.c.h.bf16 %v668
        %v682 = vunpack.c.l.bf16 %v669
        %v683 = vunpack.c.h.bf16 %v669
        %v684 = vunpack.c.l.bf16 %v670
        %v685 = vunpack.c.h.bf16 %v670
        %v686 = vunpack.c.l.bf16 %v671
        %v687 = vunpack.c.h.bf16 %v671
        %v688 = vmax.f32 %v672, 0.0
        %v689 = vmax.f32 %v673, 0.0
        %v690 = vmax.f32 %v674, 0.0
        %v691 = vmax.f32 %v675, 0.0
        %v692 = vmax.f32 %v676, 0.0
        %v693 = vmax.f32 %v677, 0.0
        %v694 = vmax.f32 %v678, 0.0
        %v695 = vmax.f32 %v679, 0.0
        %v696 = vmax.f32 %v680, 0.0
        %v697 = vmax.f32 %v681, 0.0
        %v698 = vmax.f32 %v682, 0.0
        %v699 = vmax.f32 %v683, 0.0
        %v700 = vmax.f32 %v684, 0.0
        %v701 = vmax.f32 %v685, 0.0
        %v702 = vmax.f32 %v686, 0.0
        %v703 = vmax.f32 %v687, 0.0
        %v704 = vpack.c.bf16 %v692, %v688
        %v705 = vpack.c.bf16 %v693, %v689
        %v706 = vpack.c.bf16 %v694, %v690
        %v707 = vpack.c.bf16 %v695, %v691
        %v708 = vpack.c.bf16 %v700, %v696
        %v709 = vpack.c.bf16 %v701, %v697
        %v710 = vpack.c.bf16 %v702, %v698
        %v711 = vpack.c.bf16 %v703, %v699
        %v712 = vld [vmem:[%s3] sm:$0xf]
        %v713 = vld [vmem:[%s3 + $0x4] sm:$0xf]
        %v714 = vld [vmem:[%s3 + $0x8] sm:$0xf]
        %v715 = vld [vmem:[%s3 + $0xc] sm:$0xf]
        %v716 = vld [vmem:[%s3 + $0x10] sm:$0xf]
        %v717 = vld [vmem:[%s3 + $0x14] sm:$0xf]
        %v718 = vld [vmem:[%s3 + $0x18] sm:$0xf]
        %v719 = vld [vmem:[%s3 + $0x1c] sm:$0xf]
        %v728 = vunpack.c.l.b16 %v712
        %v729 = vunpack.c.l.b16 %v713
        %v730 = vunpack.c.l.b16 %v714
        %v731 = vunpack.c.l.b16 %v715
        %v732 = vunpack.c.l.b16 %v716
        %v733 = vunpack.c.l.b16 %v717
        %v734 = vunpack.c.l.b16 %v718
        %v735 = vunpack.c.l.b16 %v719
        %v736 = vpack.c.b16 %v729, %v728
        %v737 = vpack.c.b16 %v731, %v730
        %v738 = vpack.c.b16 %v733, %v732
        %v739 = vpack.c.b16 %v735, %v734
        %vm740 = vcmask 261120
        %v742 = vsel %vm740, %v736, 0
        %v745 = vsel %vm740, %v737, 0
        %v748 = vsel %vm740, %v738, 0
        %v751 = vsel %vm740, %v739, 0
        %753 = vmatpush.bf16.msra.mxu0 0
        %754 = vmatpush.bf16.msra.mxu0 0
        %755 = vmatpush.bf16.msra.mxu0 0
        %756 = vmatpush.bf16.msra.mxu0 0
        %757 = vmatpush.bf16.msra.mxu0 0
        %758 = vmatpush.bf16.msra.mxu0 0
        %759 = vmatpush.bf16.msra.mxu0 %v708
        %760 = vmatpush.bf16.msra.mxu0 %v704
        %761 = vmatmul.bf16.gmra.mxu0 %v742
        %v762 = vpop.f32.mrf.mxu0
        %v763 = vadd.f32 0.0, %v762
        %v764 = vpop.f32.mrf.mxu0
        %v765 = vadd.f32 0.0, %v764
        %766 = vmatmul.bf16.gmra.mxu0 %v745
        %v767 = vpop.f32.mrf.mxu0
        %v768 = vadd.f32 0.0, %v767
        %v769 = vpop.f32.mrf.mxu0
        %v770 = vadd.f32 0.0, %v769
        %771 = vmatmul.bf16.gmra.mxu0 %v748
        %v772 = vpop.f32.mrf.mxu0
        %v773 = vadd.f32 0.0, %v772
        %v774 = vpop.f32.mrf.mxu0
        %v775 = vadd.f32 0.0, %v774
        %776 = vmatmul.bf16.gmra.mxu0 %v751
        %v777 = vpop.f32.mrf.mxu0
        %v778 = vadd.f32 0.0, %v777
        %v779 = vpop.f32.mrf.mxu0
        %v780 = vadd.f32 0.0, %v779
        %781 = vdwg.mxu0
        %782 = vmatpush.bf16.msra.mxu0 0
        %783 = vmatpush.bf16.msra.mxu0 0
        %784 = vmatpush.bf16.msra.mxu0 0
        %785 = vmatpush.bf16.msra.mxu0 0
        %786 = vmatpush.bf16.msra.mxu0 0
        %787 = vmatpush.bf16.msra.mxu0 0
        %788 = vmatpush.bf16.msra.mxu0 %v709
        %789 = vmatpush.bf16.msra.mxu0 %v705
        %790 = vmatmul.bf16.gmra.mxu0 %v742
        %v791 = vpop.f32.mrf.mxu0
        %v792 = vadd.f32 0.0, %v791
        %v793 = vpop.f32.mrf.mxu0
        %v794 = vadd.f32 0.0, %v793
        %795 = vmatmul.bf16.gmra.mxu0 %v745
        %v796 = vpop.f32.mrf.mxu0
        %v797 = vadd.f32 0.0, %v796
        %v798 = vpop.f32.mrf.mxu0
        %v799 = vadd.f32 0.0, %v798
        %800 = vmatmul.bf16.gmra.mxu0 %v748
        %v801 = vpop.f32.mrf.mxu0
        %v802 = vadd.f32 0.0, %v801
        %v803 = vpop.f32.mrf.mxu0
        %v804 = vadd.f32 0.0, %v803
        %805 = vmatmul.bf16.gmra.mxu0 %v751
        %v806 = vpop.f32.mrf.mxu0
        %v807 = vadd.f32 0.0, %v806
        %v808 = vpop.f32.mrf.mxu0
        %v809 = vadd.f32 0.0, %v808
        %810 = vdwg.mxu0
        %811 = vmatpush.bf16.msra.mxu0 0
        %812 = vmatpush.bf16.msra.mxu0 0
        %813 = vmatpush.bf16.msra.mxu0 0
        %814 = vmatpush.bf16.msra.mxu0 0
        %815 = vmatpush.bf16.msra.mxu0 0
        %816 = vmatpush.bf16.msra.mxu0 0
        %817 = vmatpush.bf16.msra.mxu0 %v710
        %818 = vmatpush.bf16.msra.mxu0 %v706
        %819 = vmatmul.bf16.gmra.mxu0 %v742
        %v820 = vpop.f32.mrf.mxu0
        %v821 = vadd.f32 0.0, %v820
        %v822 = vpop.f32.mrf.mxu0
        %v823 = vadd.f32 0.0, %v822
        %824 = vmatmul.bf16.gmra.mxu0 %v745
        %v825 = vpop.f32.mrf.mxu0
        %v826 = vadd.f32 0.0, %v825
        %v827 = vpop.f32.mrf.mxu0
        %v828 = vadd.f32 0.0, %v827
        %829 = vmatmul.bf16.gmra.mxu0 %v748
        %v830 = vpop.f32.mrf.mxu0
        %v831 = vadd.f32 0.0, %v830
        %v832 = vpop.f32.mrf.mxu0
        %v833 = vadd.f32 0.0, %v832
        %834 = vmatmul.bf16.gmra.mxu0 %v751
        %v835 = vpop.f32.mrf.mxu0
        %v836 = vadd.f32 0.0, %v835
        %v837 = vpop.f32.mrf.mxu0
        %v838 = vadd.f32 0.0, %v837
        %839 = vdwg.mxu0
        %840 = vmatpush.bf16.msra.mxu0 0
        %841 = vmatpush.bf16.msra.mxu0 0
        %842 = vmatpush.bf16.msra.mxu0 0
        %843 = vmatpush.bf16.msra.mxu0 0
        %844 = vmatpush.bf16.msra.mxu0 0
        %845 = vmatpush.bf16.msra.mxu0 0
        %846 = vmatpush.bf16.msra.mxu0 %v711
        %847 = vmatpush.bf16.msra.mxu0 %v707
        %848 = vmatmul.bf16.gmra.mxu0 %v742
        %v849 = vpop.f32.mrf.mxu0
        %v850 = vadd.f32 0.0, %v849
        %v851 = vpop.f32.mrf.mxu0
        %v852 = vadd.f32 0.0, %v851
        %853 = vmatmul.bf16.gmra.mxu0 %v745
        %v854 = vpop.f32.mrf.mxu0
        %v855 = vadd.f32 0.0, %v854
        %v856 = vpop.f32.mrf.mxu0
        %v857 = vadd.f32 0.0, %v856
        %858 = vmatmul.bf16.gmra.mxu0 %v748
        %v859 = vpop.f32.mrf.mxu0
        %v860 = vadd.f32 0.0, %v859
        %v861 = vpop.f32.mrf.mxu0
        %v862 = vadd.f32 0.0, %v861
        %863 = vmatmul.bf16.gmra.mxu0 %v751
        %v864 = vpop.f32.mrf.mxu0
        %v865 = vadd.f32 0.0, %v864
        %v866 = vpop.f32.mrf.mxu0
        %v867 = vadd.f32 0.0, %v866
        %868 = vdwg.mxu0
        %v869 = vpack.c.bf16 %v792, %v763
        %v870 = vpack.c.bf16 %v850, %v821
        %v871 = vpack.c.bf16 %v794, %v765
        %v872 = vpack.c.bf16 %v852, %v823
        %v873 = vpack.c.bf16 %v797, %v768
        %v874 = vpack.c.bf16 %v855, %v826
        %v875 = vpack.c.bf16 %v799, %v770
        %v876 = vpack.c.bf16 %v857, %v828
        %v877 = vpack.c.bf16 %v802, %v773
        %v878 = vpack.c.bf16 %v860, %v831
        %v879 = vpack.c.bf16 %v804, %v775
        %v880 = vpack.c.bf16 %v862, %v833
        %v881 = vpack.c.bf16 %v807, %v778
        %v882 = vpack.c.bf16 %v865, %v836
        %v883 = vpack.c.bf16 %v809, %v780
        %v884 = vpack.c.bf16 %v867, %v838
        %v885 = vld [vmem:[%s4] sm:$0xf]
        %v886 = vld [vmem:[%s4 + $0x4] sm:$0xf]
        %v887 = vld [vmem:[%s4 + $0x8] sm:$0xf]
        %v888 = vld [vmem:[%s4 + $0xc] sm:$0xf]
        %v889 = vld [vmem:[%s4 + $0x10] sm:$0xf]
        %v890 = vld [vmem:[%s4 + $0x14] sm:$0xf]
        %v891 = vld [vmem:[%s4 + $0x18] sm:$0xf]
        %v892 = vld [vmem:[%s4 + $0x1c] sm:$0xf]
        %894 = vset.pattern.permute.xlu0 0
        %895 = vperm.xlu0 %894, %v885
        %v896 = vpop.permute.xlu0 %895
        %v899 = vunpack.c.l.s4 839922192
        %v900 = vunpack.c.0.s8 %v899
        %v901 = vperm.slane %v896, %v900
        %903 = vset.pattern.permute.xlu0 0
        %904 = vperm.xlu0 %903, %v886
        %v905 = vpop.permute.xlu0 %904
        %v908 = vunpack.c.l.s4 839922192
        %v909 = vunpack.c.0.s8 %v908
        %v910 = vperm.slane %v905, %v909
        %912 = vset.pattern.permute.xlu0 0
        %913 = vperm.xlu0 %912, %v887
        %v914 = vpop.permute.xlu0 %913
        %v917 = vunpack.c.l.s4 839922192
        %v918 = vunpack.c.0.s8 %v917
        %v919 = vperm.slane %v914, %v918
        %921 = vset.pattern.permute.xlu0 0
        %922 = vperm.xlu0 %921, %v888
        %v923 = vpop.permute.xlu0 %922
        %v926 = vunpack.c.l.s4 839922192
        %v927 = vunpack.c.0.s8 %v926
        %v928 = vperm.slane %v923, %v927
        %930 = vset.pattern.permute.xlu0 0
        %931 = vperm.xlu0 %930, %v889
        %v932 = vpop.permute.xlu0 %931
        %v935 = vunpack.c.l.s4 839922192
        %v936 = vunpack.c.0.s8 %v935
        %v937 = vperm.slane %v932, %v936
        %939 = vset.pattern.permute.xlu0 0
        %940 = vperm.xlu0 %939, %v890
        %v941 = vpop.permute.xlu0 %940
        %v944 = vunpack.c.l.s4 839922192
        %v945 = vunpack.c.0.s8 %v944
        %v946 = vperm.slane %v941, %v945
        %948 = vset.pattern.permute.xlu0 0
        %949 = vperm.xlu0 %948, %v891
        %v950 = vpop.permute.xlu0 %949
        %v953 = vunpack.c.l.s4 839922192
        %v954 = vunpack.c.0.s8 %v953
        %v955 = vperm.slane %v950, %v954
        %957 = vset.pattern.permute.xlu0 0
        %958 = vperm.xlu0 %957, %v892
        %v959 = vpop.permute.xlu0 %958
        %v962 = vunpack.c.l.s4 839922192
        %v963 = vunpack.c.0.s8 %v962
        %v964 = vperm.slane %v959, %v963
        %v965 = vunpack.c.l.bf16 %v869
        %v966 = vunpack.c.h.bf16 %v869
        %v967 = vunpack.c.l.bf16 %v870
        %v968 = vunpack.c.h.bf16 %v870
        %v969 = vunpack.c.l.bf16 %v871
        %v970 = vunpack.c.h.bf16 %v871
        %v971 = vunpack.c.l.bf16 %v872
        %v972 = vunpack.c.h.bf16 %v872
        %v973 = vunpack.c.l.bf16 %v873
        %v974 = vunpack.c.h.bf16 %v873
        %v975 = vunpack.c.l.bf16 %v874
        %v976 = vunpack.c.h.bf16 %v874
        %v977 = vunpack.c.l.bf16 %v875
        %v978 = vunpack.c.h.bf16 %v875
        %v979 = vunpack.c.l.bf16 %v876
        %v980 = vunpack.c.h.bf16 %v876
        %v981 = vunpack.c.l.bf16 %v877
        %v982 = vunpack.c.h.bf16 %v877
        %v983 = vunpack.c.l.bf16 %v878
        %v984 = vunpack.c.h.bf16 %v878
        %v985 = vunpack.c.l.bf16 %v879
        %v986 = vunpack.c.h.bf16 %v879
        %v987 = vunpack.c.l.bf16 %v880
        %v988 = vunpack.c.h.bf16 %v880
        %v989 = vunpack.c.l.bf16 %v881
        %v990 = vunpack.c.h.bf16 %v881
        %v991 = vunpack.c.l.bf16 %v882
        %v992 = vunpack.c.h.bf16 %v882
        %v993 = vunpack.c.l.bf16 %v883
        %v994 = vunpack.c.h.bf16 %v883
        %v995 = vunpack.c.l.bf16 %v884
        %v996 = vunpack.c.h.bf16 %v884
        %v997 = vunpack.c.l.bf16 %v901
        %v998 = vunpack.c.l.bf16 %v910
        %v999 = vunpack.c.l.bf16 %v919
        %v1000 = vunpack.c.l.bf16 %v928
        %v1001 = vunpack.c.l.bf16 %v937
        %v1002 = vunpack.c.l.bf16 %v946
        %v1003 = vunpack.c.l.bf16 %v955
        %v1004 = vunpack.c.l.bf16 %v964
        %v1005 = vadd.f32 %v965, %v997
        %v1006 = vadd.f32 %v966, %v997
        %v1007 = vadd.f32 %v967, %v997
        %v1008 = vadd.f32 %v968, %v997
        %v1009 = vadd.f32 %v969, %v998
        %v1010 = vadd.f32 %v970, %v998
        %v1011 = vadd.f32 %v971, %v998
        %v1012 = vadd.f32 %v972, %v998
        %v1013 = vadd.f32 %v973, %v999
        %v1014 = vadd.f32 %v974, %v999
        %v1015 = vadd.f32 %v975, %v999
        %v1016 = vadd.f32 %v976, %v999
        %v1017 = vadd.f32 %v977, %v1000
        %v1018 = vadd.f32 %v978, %v1000
        %v1019 = vadd.f32 %v979, %v1000
        %v1020 = vadd.f32 %v980, %v1000
        %v1021 = vadd.f32 %v981, %v1001
        %v1022 = vadd.f32 %v982, %v1001
        %v1023 = vadd.f32 %v983, %v1001
        %v1024 = vadd.f32 %v984, %v1001
        %v1025 = vadd.f32 %v985, %v1002
        %v1026 = vadd.f32 %v986, %v1002
        %v1027 = vadd.f32 %v987, %v1002
        %v1028 = vadd.f32 %v988, %v1002
        %v1029 = vadd.f32 %v989, %v1003
        %v1030 = vadd.f32 %v990, %v1003
        %v1031 = vadd.f32 %v991, %v1003
        %v1032 = vadd.f32 %v992, %v1003
        %v1033 = vadd.f32 %v993, %v1004
        %v1034 = vadd.f32 %v994, %v1004
        %v1035 = vadd.f32 %v995, %v1004
        %v1036 = vadd.f32 %v996, %v1004
        %v1037 = vpack.c.bf16 %v1006, %v1005
        %v1038 = vpack.c.bf16 %v1008, %v1007
        %v1039 = vpack.c.bf16 %v1010, %v1009
        %v1040 = vpack.c.bf16 %v1012, %v1011
        %v1041 = vpack.c.bf16 %v1014, %v1013
        %v1042 = vpack.c.bf16 %v1016, %v1015
        %v1043 = vpack.c.bf16 %v1018, %v1017
        %v1044 = vpack.c.bf16 %v1020, %v1019
        %v1045 = vpack.c.bf16 %v1022, %v1021
        %v1046 = vpack.c.bf16 %v1024, %v1023
        %v1047 = vpack.c.bf16 %v1026, %v1025
        %v1048 = vpack.c.bf16 %v1028, %v1027
        %v1049 = vpack.c.bf16 %v1030, %v1029
        %v1050 = vpack.c.bf16 %v1032, %v1031
        %v1051 = vpack.c.bf16 %v1034, %v1033
        %v1052 = vpack.c.bf16 %v1036, %v1035
        %v1053 = vunpack.c.l.bf16 %v1037
        %v1054 = vunpack.c.h.bf16 %v1037
        %v1055 = vunpack.c.l.bf16 %v1038
        %v1056 = vunpack.c.h.bf16 %v1038
        %v1057 = vunpack.c.l.bf16 %v1039
        %v1058 = vunpack.c.h.bf16 %v1039
        %v1059 = vunpack.c.l.bf16 %v1040
        %v1060 = vunpack.c.h.bf16 %v1040
        %v1061 = vunpack.c.l.bf16 %v1041
        %v1062 = vunpack.c.h.bf16 %v1041
        %v1063 = vunpack.c.l.bf16 %v1042
        %v1064 = vunpack.c.h.bf16 %v1042
        %v1065 = vunpack.c.l.bf16 %v1043
        %v1066 = vunpack.c.h.bf16 %v1043
        %v1067 = vunpack.c.l.bf16 %v1044
        %v1068 = vunpack.c.h.bf16 %v1044
        %v1069 = vunpack.c.l.bf16 %v1045
        %v1070 = vunpack.c.h.bf16 %v1045
        %v1071 = vunpack.c.l.bf16 %v1046
        %v1072 = vunpack.c.h.bf16 %v1046
        %v1073 = vunpack.c.l.bf16 %v1047
        %v1074 = vunpack.c.h.bf16 %v1047
        %v1075 = vunpack.c.l.bf16 %v1048
        %v1076 = vunpack.c.h.bf16 %v1048
        %v1077 = vunpack.c.l.bf16 %v1049
        %v1078 = vunpack.c.h.bf16 %v1049
        %v1079 = vunpack.c.l.bf16 %v1050
        %v1080 = vunpack.c.h.bf16 %v1050
        %v1081 = vunpack.c.l.bf16 %v1051
        %v1082 = vunpack.c.h.bf16 %v1051
        %v1083 = vunpack.c.l.bf16 %v1052
        %v1084 = vunpack.c.h.bf16 %v1052
        %v1085 = vmax.f32 %v1053, 0.0
        %v1086 = vmax.f32 %v1054, 0.0
        %v1087 = vmax.f32 %v1055, 0.0
        %v1088 = vmax.f32 %v1056, 0.0
        %v1089 = vmax.f32 %v1057, 0.0
        %v1090 = vmax.f32 %v1058, 0.0
        %v1091 = vmax.f32 %v1059, 0.0
        %v1092 = vmax.f32 %v1060, 0.0
        %v1093 = vmax.f32 %v1061, 0.0
        %v1094 = vmax.f32 %v1062, 0.0
        %v1095 = vmax.f32 %v1063, 0.0
        %v1096 = vmax.f32 %v1064, 0.0
        %v1097 = vmax.f32 %v1065, 0.0
        %v1098 = vmax.f32 %v1066, 0.0
        %v1099 = vmax.f32 %v1067, 0.0
        %v1100 = vmax.f32 %v1068, 0.0
        %v1101 = vmax.f32 %v1069, 0.0
        %v1102 = vmax.f32 %v1070, 0.0
        %v1103 = vmax.f32 %v1071, 0.0
        %v1104 = vmax.f32 %v1072, 0.0
        %v1105 = vmax.f32 %v1073, 0.0
        %v1106 = vmax.f32 %v1074, 0.0
        %v1107 = vmax.f32 %v1075, 0.0
        %v1108 = vmax.f32 %v1076, 0.0
        %v1109 = vmax.f32 %v1077, 0.0
        %v1110 = vmax.f32 %v1078, 0.0
        %v1111 = vmax.f32 %v1079, 0.0
        %v1112 = vmax.f32 %v1080, 0.0
        %v1113 = vmax.f32 %v1081, 0.0
        %v1114 = vmax.f32 %v1082, 0.0
        %v1115 = vmax.f32 %v1083, 0.0
        %v1116 = vmax.f32 %v1084, 0.0
        %v1117 = vpack.c.bf16 %v1089, %v1085
        %v1118 = vpack.c.bf16 %v1090, %v1086
        %v1119 = vpack.c.bf16 %v1091, %v1087
        %v1120 = vpack.c.bf16 %v1092, %v1088
        %v1121 = vpack.c.bf16 %v1097, %v1093
        %v1122 = vpack.c.bf16 %v1098, %v1094
        %v1123 = vpack.c.bf16 %v1099, %v1095
        %v1124 = vpack.c.bf16 %v1100, %v1096
        %v1125 = vpack.c.bf16 %v1105, %v1101
        %v1126 = vpack.c.bf16 %v1106, %v1102
        %v1127 = vpack.c.bf16 %v1107, %v1103
        %v1128 = vpack.c.bf16 %v1108, %v1104
        %v1129 = vpack.c.bf16 %v1113, %v1109
        %v1130 = vpack.c.bf16 %v1114, %v1110
        %v1131 = vpack.c.bf16 %v1115, %v1111
        %v1132 = vpack.c.bf16 %v1116, %v1112
        %v1133 = vld [vmem:[%s5] sm:$0xf]
        %v1134 = vld [vmem:[%s5 + $0x4] sm:$0xf]
        %v1135 = vld [vmem:[%s5 + $0x8] sm:$0xf]
        %v1136 = vld [vmem:[%s5 + $0xc] sm:$0xf]
        %v1137 = vld [vmem:[%s5 + $0x10] sm:$0xf]
        %v1138 = vld [vmem:[%s5 + $0x14] sm:$0xf]
        %v1139 = vld [vmem:[%s5 + $0x18] sm:$0xf]
        %v1140 = vld [vmem:[%s5 + $0x1c] sm:$0xf]
        %v1149 = vunpack.c.l.b16 %v1133
        %v1150 = vunpack.c.l.b16 %v1134
        %v1151 = vunpack.c.l.b16 %v1135
        %v1152 = vunpack.c.l.b16 %v1136
        %v1153 = vunpack.c.l.b16 %v1137
        %v1154 = vunpack.c.l.b16 %v1138
        %v1155 = vunpack.c.l.b16 %v1139
        %v1156 = vunpack.c.l.b16 %v1140
        %v1157 = vpack.c.b16 %v1150, %v1149
        %v1158 = vpack.c.b16 %v1152, %v1151
        %v1159 = vpack.c.b16 %v1154, %v1153
        %v1160 = vpack.c.b16 %v1156, %v1155
        %vm1161 = vcmask 523264
        %v1163 = vsel %vm1161, %v1157, 0
        %v1166 = vsel %vm1161, %v1158, 0
        %v1169 = vsel %vm1161, %v1159, 0
        %v1172 = vsel %vm1161, %v1160, 0
        %1174 = vmatpush.bf16.msra.mxu0 0
        %1175 = vmatpush.bf16.msra.mxu0 0
        %1176 = vmatpush.bf16.msra.mxu0 0
        %1177 = vmatpush.bf16.msra.mxu0 0
        %1178 = vmatpush.bf16.msra.mxu0 %v1129
        %1179 = vmatpush.bf16.msra.mxu0 %v1125
        %1180 = vmatpush.bf16.msra.mxu0 %v1121
        %1181 = vmatpush.bf16.msra.mxu0 %v1117
        %1182 = vmatmul.bf16.gmra.mxu0 %v1163
        %v1183 = vpop.f32.mrf.mxu0
        %v1184 = vadd.f32 0.0, %v1183
        %v1185 = vpop.f32.mrf.mxu0
        %v1186 = vadd.f32 0.0, %v1185
        %1187 = vmatmul.bf16.gmra.mxu0 %v1166
        %v1188 = vpop.f32.mrf.mxu0
        %v1189 = vadd.f32 0.0, %v1188
        %v1190 = vpop.f32.mrf.mxu0
        %v1191 = vadd.f32 0.0, %v1190
        %1192 = vmatmul.bf16.gmra.mxu0 %v1169
        %v1193 = vpop.f32.mrf.mxu0
        %v1194 = vadd.f32 0.0, %v1193
        %v1195 = vpop.f32.mrf.mxu0
        %v1196 = vadd.f32 0.0, %v1195
        %1197 = vmatmul.bf16.gmra.mxu0 %v1172
        %v1198 = vpop.f32.mrf.mxu0
        %v1199 = vadd.f32 0.0, %v1198
        %v1200 = vpop.f32.mrf.mxu0
        %v1201 = vadd.f32 0.0, %v1200
        %1202 = vdwg.mxu0
        %1203 = vmatpush.bf16.msra.mxu0 0
        %1204 = vmatpush.bf16.msra.mxu0 0
        %1205 = vmatpush.bf16.msra.mxu0 0
        %1206 = vmatpush.bf16.msra.mxu0 0
        %1207 = vmatpush.bf16.msra.mxu0 %v1130
        %1208 = vmatpush.bf16.msra.mxu0 %v1126
        %1209 = vmatpush.bf16.msra.mxu0 %v1122
        %1210 = vmatpush.bf16.msra.mxu0 %v1118
        %1211 = vmatmul.bf16.gmra.mxu0 %v1163
        %v1212 = vpop.f32.mrf.mxu0
        %v1213 = vadd.f32 0.0, %v1212
        %v1214 = vpop.f32.mrf.mxu0
        %v1215 = vadd.f32 0.0, %v1214
        %1216 = vmatmul.bf16.gmra.mxu0 %v1166
        %v1217 = vpop.f32.mrf.mxu0
        %v1218 = vadd.f32 0.0, %v1217
        %v1219 = vpop.f32.mrf.mxu0
        %v1220 = vadd.f32 0.0, %v1219
        %1221 = vmatmul.bf16.gmra.mxu0 %v1169
        %v1222 = vpop.f32.mrf.mxu0
        %v1223 = vadd.f32 0.0, %v1222
        %v1224 = vpop.f32.mrf.mxu0
        %v1225 = vadd.f32 0.0, %v1224
        %1226 = vmatmul.bf16.gmra.mxu0 %v1172
        %v1227 = vpop.f32.mrf.mxu0
        %v1228 = vadd.f32 0.0, %v1227
        %v1229 = vpop.f32.mrf.mxu0
        %v1230 = vadd.f32 0.0, %v1229
        %1231 = vdwg.mxu0
        %1232 = vmatpush.bf16.msra.mxu0 0
        %1233 = vmatpush.bf16.msra.mxu0 0
        %1234 = vmatpush.bf16.msra.mxu0 0
        %1235 = vmatpush.bf16.msra.mxu0 0
        %1236 = vmatpush.bf16.msra.mxu0 %v1131
        %1237 = vmatpush.bf16.msra.mxu0 %v1127
        %1238 = vmatpush.bf16.msra.mxu0 %v1123
        %1239 = vmatpush.bf16.msra.mxu0 %v1119
        %1240 = vmatmul.bf16.gmra.mxu0 %v1163
        %v1241 = vpop.f32.mrf.mxu0
        %v1242 = vadd.f32 0.0, %v1241
        %v1243 = vpop.f32.mrf.mxu0
        %v1244 = vadd.f32 0.0, %v1243
        %1245 = vmatmul.bf16.gmra.mxu0 %v1166
        %v1246 = vpop.f32.mrf.mxu0
        %v1247 = vadd.f32 0.0, %v1246
        %v1248 = vpop.f32.mrf.mxu0
        %v1249 = vadd.f32 0.0, %v1248
        %1250 = vmatmul.bf16.gmra.mxu0 %v1169
        %v1251 = vpop.f32.mrf.mxu0
        %v1252 = vadd.f32 0.0, %v1251
        %v1253 = vpop.f32.mrf.mxu0
        %v1254 = vadd.f32 0.0, %v1253
        %1255 = vmatmul.bf16.gmra.mxu0 %v1172
        %v1256 = vpop.f32.mrf.mxu0
        %v1257 = vadd.f32 0.0, %v1256
        %v1258 = vpop.f32.mrf.mxu0
        %v1259 = vadd.f32 0.0, %v1258
        %1260 = vdwg.mxu0
        %1261 = vmatpush.bf16.msra.mxu0 0
        %1262 = vmatpush.bf16.msra.mxu0 0
        %1263 = vmatpush.bf16.msra.mxu0 0
        %1264 = vmatpush.bf16.msra.mxu0 0
        %1265 = vmatpush.bf16.msra.mxu0 %v1132
        %1266 = vmatpush.bf16.msra.mxu0 %v1128
        %1267 = vmatpush.bf16.msra.mxu0 %v1124
        %1268 = vmatpush.bf16.msra.mxu0 %v1120
        %1269 = vmatmul.bf16.gmra.mxu0 %v1163
        %v1270 = vpop.f32.mrf.mxu0
        %v1271 = vadd.f32 0.0, %v1270
        %v1272 = vpop.f32.mrf.mxu0
        %v1273 = vadd.f32 0.0, %v1272
        %1274 = vmatmul.bf16.gmra.mxu0 %v1166
        %v1275 = vpop.f32.mrf.mxu0
        %v1276 = vadd.f32 0.0, %v1275
        %v1277 = vpop.f32.mrf.mxu0
        %v1278 = vadd.f32 0.0, %v1277
        %1279 = vmatmul.bf16.gmra.mxu0 %v1169
        %v1280 = vpop.f32.mrf.mxu0
        %v1281 = vadd.f32 0.0, %v1280
        %v1282 = vpop.f32.mrf.mxu0
        %v1283 = vadd.f32 0.0, %v1282
        %1284 = vmatmul.bf16.gmra.mxu0 %v1172
        %v1285 = vpop.f32.mrf.mxu0
        %v1286 = vadd.f32 0.0, %v1285
        %v1287 = vpop.f32.mrf.mxu0
        %v1288 = vadd.f32 0.0, %v1287
        %1289 = vdwg.mxu0
        %v1290 = vpack.c.bf16 %v1213, %v1184
        %v1291 = vpack.c.bf16 %v1271, %v1242
        %v1292 = vpack.c.bf16 %v1215, %v1186
        %v1293 = vpack.c.bf16 %v1273, %v1244
        %v1294 = vpack.c.bf16 %v1218, %v1189
        %v1295 = vpack.c.bf16 %v1276, %v1247
        %v1296 = vpack.c.bf16 %v1220, %v1191
        %v1297 = vpack.c.bf16 %v1278, %v1249
        %v1298 = vpack.c.bf16 %v1223, %v1194
        %v1299 = vpack.c.bf16 %v1281, %v1252
        %v1300 = vpack.c.bf16 %v1225, %v1196
        %v1301 = vpack.c.bf16 %v1283, %v1254
        %v1302 = vpack.c.bf16 %v1228, %v1199
        %v1303 = vpack.c.bf16 %v1286, %v1257
        %v1304 = vpack.c.bf16 %v1230, %v1201
        %v1305 = vpack.c.bf16 %v1288, %v1259
        %v1306 = vld [vmem:[%s6] sm:$0xf]
        %v1307 = vld [vmem:[%s6 + $0x4] sm:$0xf]
        %v1308 = vld [vmem:[%s6 + $0x8] sm:$0xf]
        %v1309 = vld [vmem:[%s6 + $0xc] sm:$0xf]
        %v1310 = vld [vmem:[%s6 + $0x10] sm:$0xf]
        %v1311 = vld [vmem:[%s6 + $0x14] sm:$0xf]
        %v1312 = vld [vmem:[%s6 + $0x18] sm:$0xf]
        %v1313 = vld [vmem:[%s6 + $0x1c] sm:$0xf]
        %1315 = vset.pattern.permute.xlu0 0
        %1316 = vperm.xlu0 %1315, %v1306
        %v1317 = vpop.permute.xlu0 %1316
        %v1320 = vunpack.c.l.s4 839922192
        %v1321 = vunpack.c.0.s8 %v1320
        %v1322 = vperm.slane %v1317, %v1321
        %1324 = vset.pattern.permute.xlu0 0
        %1325 = vperm.xlu0 %1324, %v1307
        %v1326 = vpop.permute.xlu0 %1325
        %v1329 = vunpack.c.l.s4 839922192
        %v1330 = vunpack.c.0.s8 %v1329
        %v1331 = vperm.slane %v1326, %v1330
        %1333 = vset.pattern.permute.xlu0 0
        %1334 = vperm.xlu0 %1333, %v1308
        %v1335 = vpop.permute.xlu0 %1334
        %v1338 = vunpack.c.l.s4 839922192
        %v1339 = vunpack.c.0.s8 %v1338
        %v1340 = vperm.slane %v1335, %v1339
        %1342 = vset.pattern.permute.xlu0 0
        %1343 = vperm.xlu0 %1342, %v1309
        %v1344 = vpop.permute.xlu0 %1343
        %v1347 = vunpack.c.l.s4 839922192
        %v1348 = vunpack.c.0.s8 %v1347
        %v1349 = vperm.slane %v1344, %v1348
        %1351 = vset.pattern.permute.xlu0 0
        %1352 = vperm.xlu0 %1351, %v1310
        %v1353 = vpop.permute.xlu0 %1352
        %v1356 = vunpack.c.l.s4 839922192
        %v1357 = vunpack.c.0.s8 %v1356
        %v1358 = vperm.slane %v1353, %v1357
        %1360 = vset.pattern.permute.xlu0 0
        %1361 = vperm.xlu0 %1360, %v1311
        %v1362 = vpop.permute.xlu0 %1361
        %v1365 = vunpack.c.l.s4 839922192
        %v1366 = vunpack.c.0.s8 %v1365
        %v1367 = vperm.slane %v1362, %v1366
        %1369 = vset.pattern.permute.xlu0 0
        %1370 = vperm.xlu0 %1369, %v1312
        %v1371 = vpop.permute.xlu0 %1370
        %v1374 = vunpack.c.l.s4 839922192
        %v1375 = vunpack.c.0.s8 %v1374
        %v1376 = vperm.slane %v1371, %v1375
        %1378 = vset.pattern.permute.xlu0 0
        %1379 = vperm.xlu0 %1378, %v1313
        %v1380 = vpop.permute.xlu0 %1379
        %v1383 = vunpack.c.l.s4 839922192
        %v1384 = vunpack.c.0.s8 %v1383
        %v1385 = vperm.slane %v1380, %v1384
        %v1386 = vunpack.c.l.bf16 %v1290
        %v1387 = vunpack.c.h.bf16 %v1290
        %v1388 = vunpack.c.l.bf16 %v1291
        %v1389 = vunpack.c.h.bf16 %v1291
        %v1390 = vunpack.c.l.bf16 %v1292
        %v1391 = vunpack.c.h.bf16 %v1292
        %v1392 = vunpack.c.l.bf16 %v1293
        %v1393 = vunpack.c.h.bf16 %v1293
        %v1394 = vunpack.c.l.bf16 %v1294
        %v1395 = vunpack.c.h.bf16 %v1294
        %v1396 = vunpack.c.l.bf16 %v1295
        %v1397 = vunpack.c.h.bf16 %v1295
        %v1398 = vunpack.c.l.bf16 %v1296
        %v1399 = vunpack.c.h.bf16 %v1296
        %v1400 = vunpack.c.l.bf16 %v1297
        %v1401 = vunpack.c.h.bf16 %v1297
        %v1402 = vunpack.c.l.bf16 %v1298
        %v1403 = vunpack.c.h.bf16 %v1298
        %v1404 = vunpack.c.l.bf16 %v1299
        %v1405 = vunpack.c.h.bf16 %v1299
        %v1406 = vunpack.c.l.bf16 %v1300
        %v1407 = vunpack.c.h.bf16 %v1300
        %v1408 = vunpack.c.l.bf16 %v1301
        %v1409 = vunpack.c.h.bf16 %v1301
        %v1410 = vunpack.c.l.bf16 %v1302
        %v1411 = vunpack.c.h.bf16 %v1302
        %v1412 = vunpack.c.l.bf16 %v1303
        %v1413 = vunpack.c.h.bf16 %v1303
        %v1414 = vunpack.c.l.bf16 %v1304
        %v1415 = vunpack.c.h.bf16 %v1304
        %v1416 = vunpack.c.l.bf16 %v1305
        %v1417 = vunpack.c.h.bf16 %v1305
        %v1418 = vunpack.c.l.bf16 %v1322
        %v1419 = vunpack.c.l.bf16 %v1331
        %v1420 = vunpack.c.l.bf16 %v1340
        %v1421 = vunpack.c.l.bf16 %v1349
        %v1422 = vunpack.c.l.bf16 %v1358
        %v1423 = vunpack.c.l.bf16 %v1367
        %v1424 = vunpack.c.l.bf16 %v1376
        %v1425 = vunpack.c.l.bf16 %v1385
        %v1426 = vadd.f32 %v1386, %v1418
        %v1427 = vadd.f32 %v1387, %v1418
        %v1428 = vadd.f32 %v1388, %v1418
        %v1429 = vadd.f32 %v1389, %v1418
        %v1430 = vadd.f32 %v1390, %v1419
        %v1431 = vadd.f32 %v1391, %v1419
        %v1432 = vadd.f32 %v1392, %v1419
        %v1433 = vadd.f32 %v1393, %v1419
        %v1434 = vadd.f32 %v1394, %v1420
        %v1435 = vadd.f32 %v1395, %v1420
        %v1436 = vadd.f32 %v1396, %v1420
        %v1437 = vadd.f32 %v1397, %v1420
        %v1438 = vadd.f32 %v1398, %v1421
        %v1439 = vadd.f32 %v1399, %v1421
        %v1440 = vadd.f32 %v1400, %v1421
        %v1441 = vadd.f32 %v1401, %v1421
        %v1442 = vadd.f32 %v1402, %v1422
        %v1443 = vadd.f32 %v1403, %v1422
        %v1444 = vadd.f32 %v1404, %v1422
        %v1445 = vadd.f32 %v1405, %v1422
        %v1446 = vadd.f32 %v1406, %v1423
        %v1447 = vadd.f32 %v1407, %v1423
        %v1448 = vadd.f32 %v1408, %v1423
        %v1449 = vadd.f32 %v1409, %v1423
        %v1450 = vadd.f32 %v1410, %v1424
        %v1451 = vadd.f32 %v1411, %v1424
        %v1452 = vadd.f32 %v1412, %v1424
        %v1453 = vadd.f32 %v1413, %v1424
        %v1454 = vadd.f32 %v1414, %v1425
        %v1455 = vadd.f32 %v1415, %v1425
        %v1456 = vadd.f32 %v1416, %v1425
        %v1457 = vadd.f32 %v1417, %v1425
        %v1458 = vpack.c.bf16 %v1427, %v1426
        %v1459 = vpack.c.bf16 %v1429, %v1428
        %v1460 = vpack.c.bf16 %v1431, %v1430
        %v1461 = vpack.c.bf16 %v1433, %v1432
        %v1462 = vpack.c.bf16 %v1435, %v1434
        %v1463 = vpack.c.bf16 %v1437, %v1436
        %v1464 = vpack.c.bf16 %v1439, %v1438
        %v1465 = vpack.c.bf16 %v1441, %v1440
        %v1466 = vpack.c.bf16 %v1443, %v1442
        %v1467 = vpack.c.bf16 %v1445, %v1444
        %v1468 = vpack.c.bf16 %v1447, %v1446
        %v1469 = vpack.c.bf16 %v1449, %v1448
        %v1470 = vpack.c.bf16 %v1451, %v1450
        %v1471 = vpack.c.bf16 %v1453, %v1452
        %v1472 = vpack.c.bf16 %v1455, %v1454
        %v1473 = vpack.c.bf16 %v1457, %v1456
        %v1474 = vunpack.c.l.bf16 %v1458
        %v1475 = vunpack.c.h.bf16 %v1458
        %v1476 = vunpack.c.l.bf16 %v1459
        %v1477 = vunpack.c.h.bf16 %v1459
        %v1478 = vunpack.c.l.bf16 %v1460
        %v1479 = vunpack.c.h.bf16 %v1460
        %v1480 = vunpack.c.l.bf16 %v1461
        %v1481 = vunpack.c.h.bf16 %v1461
        %v1482 = vunpack.c.l.bf16 %v1462
        %v1483 = vunpack.c.h.bf16 %v1462
        %v1484 = vunpack.c.l.bf16 %v1463
        %v1485 = vunpack.c.h.bf16 %v1463
        %v1486 = vunpack.c.l.bf16 %v1464
        %v1487 = vunpack.c.h.bf16 %v1464
        %v1488 = vunpack.c.l.bf16 %v1465
        %v1489 = vunpack.c.h.bf16 %v1465
        %v1490 = vunpack.c.l.bf16 %v1466
        %v1491 = vunpack.c.h.bf16 %v1466
        %v1492 = vunpack.c.l.bf16 %v1467
        %v1493 = vunpack.c.h.bf16 %v1467
        %v1494 = vunpack.c.l.bf16 %v1468
        %v1495 = vunpack.c.h.bf16 %v1468
        %v1496 = vunpack.c.l.bf16 %v1469
        %v1497 = vunpack.c.h.bf16 %v1469
        %v1498 = vunpack.c.l.bf16 %v1470
        %v1499 = vunpack.c.h.bf16 %v1470
        %v1500 = vunpack.c.l.bf16 %v1471
        %v1501 = vunpack.c.h.bf16 %v1471
        %v1502 = vunpack.c.l.bf16 %v1472
        %v1503 = vunpack.c.h.bf16 %v1472
        %v1504 = vunpack.c.l.bf16 %v1473
        %v1505 = vunpack.c.h.bf16 %v1473
        %v1506 = vmax.f32 %v1474, 0.0
        %v1507 = vmax.f32 %v1475, 0.0
        %v1508 = vmax.f32 %v1476, 0.0
        %v1509 = vmax.f32 %v1477, 0.0
        %v1510 = vmax.f32 %v1478, 0.0
        %v1511 = vmax.f32 %v1479, 0.0
        %v1512 = vmax.f32 %v1480, 0.0
        %v1513 = vmax.f32 %v1481, 0.0
        %v1514 = vmax.f32 %v1482, 0.0
        %v1515 = vmax.f32 %v1483, 0.0
        %v1516 = vmax.f32 %v1484, 0.0
        %v1517 = vmax.f32 %v1485, 0.0
        %v1518 = vmax.f32 %v1486, 0.0
        %v1519 = vmax.f32 %v1487, 0.0
        %v1520 = vmax.f32 %v1488, 0.0
        %v1521 = vmax.f32 %v1489, 0.0
        %v1522 = vmax.f32 %v1490, 0.0
        %v1523 = vmax.f32 %v1491, 0.0
        %v1524 = vmax.f32 %v1492, 0.0
        %v1525 = vmax.f32 %v1493, 0.0
        %v1526 = vmax.f32 %v1494, 0.0
        %v1527 = vmax.f32 %v1495, 0.0
        %v1528 = vmax.f32 %v1496, 0.0
        %v1529 = vmax.f32 %v1497, 0.0
        %v1530 = vmax.f32 %v1498, 0.0
        %v1531 = vmax.f32 %v1499, 0.0
        %v1532 = vmax.f32 %v1500, 0.0
        %v1533 = vmax.f32 %v1501, 0.0
        %v1534 = vmax.f32 %v1502, 0.0
        %v1535 = vmax.f32 %v1503, 0.0
        %v1536 = vmax.f32 %v1504, 0.0
        %v1537 = vmax.f32 %v1505, 0.0
        %v1538 = vpack.c.bf16 %v1510, %v1506
        %v1539 = vpack.c.bf16 %v1511, %v1507
        %v1540 = vpack.c.bf16 %v1512, %v1508
        %v1541 = vpack.c.bf16 %v1513, %v1509
        %v1542 = vpack.c.bf16 %v1518, %v1514
        %v1543 = vpack.c.bf16 %v1519, %v1515
        %v1544 = vpack.c.bf16 %v1520, %v1516
        %v1545 = vpack.c.bf16 %v1521, %v1517
        %v1546 = vpack.c.bf16 %v1526, %v1522
        %v1547 = vpack.c.bf16 %v1527, %v1523
        %v1548 = vpack.c.bf16 %v1528, %v1524
        %v1549 = vpack.c.bf16 %v1529, %v1525
        %v1550 = vpack.c.bf16 %v1534, %v1530
        %v1551 = vpack.c.bf16 %v1535, %v1531
        %v1552 = vpack.c.bf16 %v1536, %v1532
        %v1553 = vpack.c.bf16 %v1537, %v1533
        %v1554 = vld [vmem:[#allocation7] sm:$0xf]
        %v1555 = vld [vmem:[#allocation7 + $0x4] sm:$0xf]
        %v1556 = vld [vmem:[#allocation7 + $0x8] sm:$0xf]
        %v1557 = vld [vmem:[#allocation7 + $0xc] sm:$0xf]
        %v1558 = vld [vmem:[%s8] sm:$0xff]
        %v1559 = vld [vmem:[%s8 + $0x8] sm:$0xff]
        %v1560 = vld [vmem:[%s8 + $0x10] sm:$0xff]
        %v1561 = vld [vmem:[%s8 + $0x18] sm:$0xff]
        %1563 = vset.pattern.permute.xlu0 0
        %1564 = vperm.xlu0 %1563, %v1558
        %v1565 = vpop.permute.xlu0 %1564
        %1568 = vset.pattern.permute.xlu0 0
        %1569 = vperm.xlu0 %1568, %v1559
        %v1570 = vpop.permute.xlu0 %1569
        %1573 = vset.pattern.permute.xlu0 0
        %1574 = vperm.xlu0 %1573, %v1560
        %v1575 = vpop.permute.xlu0 %1574
        %1578 = vset.pattern.permute.xlu0 0
        %1579 = vperm.xlu0 %1578, %v1561
        %v1580 = vpop.permute.xlu0 %1579
        %v1586 = vunpack.c.l.b16 %v1554
        %v1587 = vunpack.c.l.b16 %v1555
        %v1588 = vunpack.c.l.b16 %v1556
        %v1589 = vunpack.c.l.b16 %v1557
        %v1590 = vpack.c.b16 %v1587, %v1586
        %v1591 = vpack.c.b16 %v1589, %v1588
        %v1593 = vsel %vm1161, %v1590, 0
        %v1596 = vsel %vm1161, %v1591, 0
        %1598 = vmatpush.bf16.msra.mxu0 0
        %1599 = vmatpush.bf16.msra.mxu0 0
        %1600 = vmatpush.bf16.msra.mxu0 0
        %1601 = vmatpush.bf16.msra.mxu0 0
        %1602 = vmatpush.bf16.msra.mxu0 %v1550
        %1603 = vmatpush.bf16.msra.mxu0 %v1546
        %1604 = vmatpush.bf16.msra.mxu0 %v1542
        %1605 = vmatpush.bf16.msra.mxu0 %v1538
        %1606 = vmatmul.bf16.gmra.mxu0 %v1593
        %v1607 = vpop.f32.mrf.mxu0
        %v1608 = vadd.f32 %v1565, %v1607
        %v1609 = vpop.f32.mrf.mxu0
        %v1610 = vadd.f32 %v1570, %v1609
        %1611 = vmatmul.bf16.gmra.mxu0 %v1596
        %v1612 = vpop.f32.mrf.mxu0
        %v1613 = vadd.f32 %v1575, %v1612
        %v1614 = vpop.f32.mrf.mxu0
        %v1615 = vadd.f32 %v1580, %v1614
        %1616 = vdwg.mxu0
        %1617 = vmatpush.bf16.msra.mxu0 0
        %1618 = vmatpush.bf16.msra.mxu0 0
        %1619 = vmatpush.bf16.msra.mxu0 0
        %1620 = vmatpush.bf16.msra.mxu0 0
        %1621 = vmatpush.bf16.msra.mxu0 %v1551
        %1622 = vmatpush.bf16.msra.mxu0 %v1547
        %1623 = vmatpush.bf16.msra.mxu0 %v1543
        %1624 = vmatpush.bf16.msra.mxu0 %v1539
        %1625 = vmatmul.bf16.gmra.mxu0 %v1593
        %v1626 = vpop.f32.mrf.mxu0
        %v1627 = vadd.f32 %v1565, %v1626
        %v1628 = vpop.f32.mrf.mxu0
        %v1629 = vadd.f32 %v1570, %v1628
        %1630 = vmatmul.bf16.gmra.mxu0 %v1596
        %v1631 = vpop.f32.mrf.mxu0
        %v1632 = vadd.f32 %v1575, %v1631
        %v1633 = vpop.f32.mrf.mxu0
        %v1634 = vadd.f32 %v1580, %v1633
        %1635 = vdwg.mxu0
        %1636 = vmatpush.bf16.msra.mxu0 0
        %1637 = vmatpush.bf16.msra.mxu0 0
        %1638 = vmatpush.bf16.msra.mxu0 0
        %1639 = vmatpush.bf16.msra.mxu0 0
        %1640 = vmatpush.bf16.msra.mxu0 %v1552
        %1641 = vmatpush.bf16.msra.mxu0 %v1548
        %1642 = vmatpush.bf16.msra.mxu0 %v1544
        %1643 = vmatpush.bf16.msra.mxu0 %v1540
        %1644 = vmatmul.bf16.gmra.mxu0 %v1593
        %v1645 = vpop.f32.mrf.mxu0
        %v1646 = vadd.f32 %v1565, %v1645
        %v1647 = vpop.f32.mrf.mxu0
        %v1648 = vadd.f32 %v1570, %v1647
        %1649 = vmatmul.bf16.gmra.mxu0 %v1596
        %v1650 = vpop.f32.mrf.mxu0
        %v1651 = vadd.f32 %v1575, %v1650
        %v1652 = vpop.f32.mrf.mxu0
        %v1653 = vadd.f32 %v1580, %v1652
        %1654 = vdwg.mxu0
        %1655 = vmatpush.bf16.msra.mxu0 0
        %1656 = vmatpush.bf16.msra.mxu0 0
        %1657 = vmatpush.bf16.msra.mxu0 0
        %1658 = vmatpush.bf16.msra.mxu0 0
        %1659 = vmatpush.bf16.msra.mxu0 %v1553
        %1660 = vmatpush.bf16.msra.mxu0 %v1549
        %1661 = vmatpush.bf16.msra.mxu0 %v1545
        %1662 = vmatpush.bf16.msra.mxu0 %v1541
        %1663 = vmatmul.bf16.gmra.mxu0 %v1593
        %v1664 = vpop.f32.mrf.mxu0
        %v1665 = vadd.f32 %v1565, %v1664
        %v1666 = vpop.f32.mrf.mxu0
        %v1667 = vadd.f32 %v1570, %v1666
        %1668 = vmatmul.bf16.gmra.mxu0 %v1596
        %v1669 = vpop.f32.mrf.mxu0
        %v1670 = vadd.f32 %v1575, %v1669
        %v1671 = vpop.f32.mrf.mxu0
        %v1672 = vadd.f32 %v1580, %v1671
        %1673 = vdwg.mxu0
        %v1674 = vmax.f32 %v1608, 0.0
        %v1675 = vmax.f32 %v1627, 0.0
        %v1676 = vmax.f32 %v1646, 0.0
        %v1677 = vmax.f32 %v1665, 0.0
        %v1678 = vmax.f32 %v1610, 0.0
        %v1679 = vmax.f32 %v1629, 0.0
        %v1680 = vmax.f32 %v1648, 0.0
        %v1681 = vmax.f32 %v1667, 0.0
        %v1682 = vmax.f32 %v1613, 0.0
        %v1683 = vmax.f32 %v1632, 0.0
        %v1684 = vmax.f32 %v1651, 0.0
        %v1685 = vmax.f32 %v1670, 0.0
        %v1686 = vmax.f32 %v1615, 0.0
        %v1687 = vmax.f32 %v1634, 0.0
        %v1688 = vmax.f32 %v1653, 0.0
        %v1689 = vmax.f32 %v1672, 0.0
        %v1690 = vld [vmem:[#allocation8] sm:$0xff]
        %v1691 = vld [vmem:[#allocation8 + $0x8] sm:$0xff]
        %v1692 = vld [vmem:[#allocation8 + $0x10] sm:$0xff]
        %v1693 = vld [vmem:[#allocation8 + $0x18] sm:$0xff]
        %1695 = vset.pattern.permute.xlu0 0
        %1696 = vperm.xlu0 %1695, %v1690
        %v1697 = vpop.permute.xlu0 %1696
        %1700 = vset.pattern.permute.xlu0 0
        %1701 = vperm.xlu0 %1700, %v1691
        %v1702 = vpop.permute.xlu0 %1701
        %1705 = vset.pattern.permute.xlu0 0
        %1706 = vperm.xlu0 %1705, %v1692
        %v1707 = vpop.permute.xlu0 %1706
        %1710 = vset.pattern.permute.xlu0 0
        %1711 = vperm.xlu0 %1710, %v1693
        %v1712 = vpop.permute.xlu0 %1711
        %v1714 = vmul.f32 %v1697, %v1674
        %v1715 = vmul.f32 %v1697, %v1675
        %v1716 = vmul.f32 %v1697, %v1676
        %v1717 = vmul.f32 %v1697, %v1677
        %v1718 = vmul.f32 %v1702, %v1678
        %v1719 = vmul.f32 %v1702, %v1679
        %v1720 = vmul.f32 %v1702, %v1680
        %v1721 = vmul.f32 %v1702, %v1681
        %v1722 = vmul.f32 %v1707, %v1682
        %v1723 = vmul.f32 %v1707, %v1683
        %v1724 = vmul.f32 %v1707, %v1684
        %v1725 = vmul.f32 %v1707, %v1685
        %v1726 = vmul.f32 %v1712, %v1686
        %v1727 = vmul.f32 %v1712, %v1687
        %v1728 = vmul.f32 %v1712, %v1688
        %v1729 = vmul.f32 %v1712, %v1689
        %v1730 = vadd.f32 %v1714, %v1718
        %v1731 = vadd.f32 %v1730, %v1722
        %v1732 = vadd.f32 %v1731, %v1726
        %v1733 = vrot.slane %v1732, 4
        %v1734 = vadd.f32 %v1732, %v1733
        %v1735 = vrot.slane %v1734, 2
        %v1736 = vadd.f32 %v1734, %v1735
        %v1737 = vrot.slane %v1736, 1
        %v1738 = vadd.f32 %v1736, %v1737
        %v1739 = vadd.f32 %v1715, %v1719
        %v1740 = vadd.f32 %v1739, %v1723
        %v1741 = vadd.f32 %v1740, %v1727
        %v1742 = vrot.slane %v1741, 4
        %v1743 = vadd.f32 %v1741, %v1742
        %v1744 = vrot.slane %v1743, 2
        %v1745 = vadd.f32 %v1743, %v1744
        %v1746 = vrot.slane %v1745, 1
        %v1747 = vadd.f32 %v1745, %v1746
        %v1748 = vadd.f32 %v1716, %v1720
        %v1749 = vadd.f32 %v1748, %v1724
        %v1750 = vadd.f32 %v1749, %v1728
        %v1751 = vrot.slane %v1750, 4
        %v1752 = vadd.f32 %v1750, %v1751
        %v1753 = vrot.slane %v1752, 2
        %v1754 = vadd.f32 %v1752, %v1753
        %v1755 = vrot.slane %v1754, 1
        %v1756 = vadd.f32 %v1754, %v1755
        %v1757 = vadd.f32 %v1717, %v1721
        %v1758 = vadd.f32 %v1757, %v1725
        %v1759 = vadd.f32 %v1758, %v1729
        %v1760 = vrot.slane %v1759, 4
        %v1761 = vadd.f32 %v1759, %v1760
        %v1762 = vrot.slane %v1761, 2
        %v1763 = vadd.f32 %v1761, %v1762
        %v1764 = vrot.slane %v1763, 1
        %v1765 = vadd.f32 %v1763, %v1764
        %v1766 = vld [vmem:[#allocation2] sm:$0x1]
        %1768 = vset.pattern.permute.xlu0 0
        %1769 = vperm.xlu0 %1768, %v1766
        %v1770 = vpop.permute.xlu0 %1769
        %v1772 = vperm.slane %v1770, 0
        %v1773 = vadd.f32 %v1738, %v1772
        %v1774 = vadd.f32 %v1747, %v1772
        %v1775 = vadd.f32 %v1756, %v1772
        %v1776 = vadd.f32 %v1765, %v1772
        %v1781 = vrot.slane %v1774, 7
        %v1782 = vrot.slane %v1775, 6
        %v1783 = vrot.slane %v1776, 5
        %vm1784 = vcmask 1040384
        %v1785 = vsel %vm1784, %v1773, %v1781
        %vm1786 = vcmask 1042434
        %v1787 = vsel %vm1786, %v1782, %v1783
        %vm1788 = vcmask 1041408
        %v1789 = vsel %vm1788, %v1785, %v1787
        %v1791 = vlaneseq
        %vm1792 = vcmp.ge.s32.totalorder %v1791, 0
        %vm1793 = vcmp.lt.s32.totalorder %v1791, 512
        %vm1794 = vmand %vm1792, %vm1793
        %1795 = vst.msk [vmem:[%s455] sm:$0xf] %vm1794, %v1789
        %s1796 = smul.u32 4, %s27
        %p1797 = scmp.lt.s32.totalorder %s1796, 7
        %s1798 = scalar_select %p1797, %s1796, 7
        %s1799 = scalar_lea.vmem %s11, %s1798
        // Predicated region
        $region81: #{_lambda_.1} parent=63 // pred_check
          %p1800 = pneg %p281
        $region82: #{_lambda_.1} parent=63 // pred_check_branch
          %1802 = sbr.rel (%p1800) target = $region84
        $region83: #{_lambda_.1} parent=63 // pred_region
          %s1803 = smul.u32 4, %s27
        $region84: #{_lambda_.1} parent=63 // pred_fallthru
          _
      $region64: #{_lambda_.1} parent=5 // pred_fallthru
        _
      %p1804 = scmp.le.s32.totalorder 2, %s22
      // Predicated region
      $region85: #{_lambda_.1} parent=5 // pred_check
        %p1805 = pneg %p1804
      $region86: #{_lambda_.1} parent=5 // pred_check_branch
        %1807 = sbr.rel (%p1805) target = $region88
      $region87: #{_lambda_.1} parent=5 // pred_region
        %s1808 = ssub.s32 %s22, 2
        // Predicated region
        $region89: #{_lambda_.1} parent=87 // pred_check
          %p1809 = pneg %p287
        $region90: #{_lambda_.1} parent=87 // pred_check_branch
          %1811 = sbr.rel (%p1809) target = $region92
        $region91: #{_lambda_.1} parent=87 // pred_region
          %s1812 = smul.u32 4, %s28
          %p1813 = scmp.lt.s32.totalorder %s1812, 7
          %s1814 = scalar_select %p1813, %s1812, 7
          %s1815 = scalar_lea.vmem %s11, %s1814
        $region92: #{_lambda_.1} parent=87 // pred_fallthru
          _
      $region88: #{_lambda_.1} parent=5 // pred_fallthru
        _
    $region6: #{_lambda_.1} parent=1 // loop_footer
      %s26 = sadd.s32 1, %s22
    $region7: #{_lambda_.1} parent=1 // loop_footer_branch
      %21 = sbr.rel target = $region3
    $region8: #{_lambda_.1} parent=1 // loop_exit
      _
    %1816 = vsyncpa [#allocation4], 1
    %s1817 = scalar_lea.sflag [#allocation4], 1
    %1818 = vsyncpa %s1817, 1
    %1819 = vsyncpa [#allocation6], 1
    %1820 = vsyncpa [#allocation9], 1

</llo_original>
